<compile_context>
chip_gen: v6e
topology: v6e:2x2x1
jax: 0.10.0
libtpu: 0.0.40
codegen_flags: <defaults>
</compile_context>

<pallas_src>
import jax
import jax.numpy as jnp
import numpy as np
from jax.experimental import pallas as pl
from jax.experimental.pallas import tpu as pltpu

# ---------------- model hyper-parameters (small, forward-consistent) -------------
VOCAB_SIZE = 50
OUTPUT_SIZE = 1
EMBEDDING_DIM = 32
HIDDEN_DIM = 32
N_LAYERS = 2
BATCH = 2
SEQ = 8


# ---------------------------- fused Pallas kernel ---------------------------------
def sentiment_fused_kernel(x_ref,      # (T*Bp, E)  time-major flattened embeddings
                           wih0_ref,   # (E, 4H)   layer-0 W_ih^T
                           whh0_ref,   # (H, 4H)   layer-0 W_hh^T
                           b0_ref,     # (1, 4H)   layer-0 b_ih + b_hh
                           wih1_ref,   # (H, 4H)   layer-1 W_ih^T
                           whh1_ref,   # (H, 4H)   layer-1 W_hh^T
                           b1_ref,     # (1, 4H)   layer-1 b_ih + b_hh
                           wfc_ref,    # (H, O)    fc weight^T
                           bfc_ref,    # (1, O)    fc bias
                           h0_ref,     # (L, Bp, H) initial hidden
                           c0_ref,     # (L, Bp, H) initial cell
                           out_ref,    # (Bp, O)   sigmoid(fc(h_T)) of the top layer
                           hn_ref,     # (L, Bp, H) final hidden
                           cn_ref,     # (L, Bp, H) final cell
                           mid_ref):   # scratch (T*Bp, H): layer-0 outputs
    L, Bp, H = h0_ref.shape
    T = x_ref.shape[0] // Bp

    def lstm_scan(xproj, whh_ref, h, c, store_mid):
        """Serial recurrence; xproj already holds x@W_ih^T + b for every step."""
        w = whh_ref[...]
        for t in range(T):                      # small static trip count -> unrolled
            g = xproj[t * Bp:(t + 1) * Bp, :] + jnp.dot(
                h, w, preferred_element_type=jnp.float32)
            # PyTorch gate ordering: i, f, g, o
            i_g = jax.nn.sigmoid(g[:, 0 * H:1 * H])
            f_g = jax.nn.sigmoid(g[:, 1 * H:2 * H])
            g_g = jnp.tanh(g[:, 2 * H:3 * H])
            o_g = jax.nn.sigmoid(g[:, 3 * H:4 * H])
            c = f_g * c + i_g * g_g
            h = o_g * jnp.tanh(c)
            if store_mid:
                mid_ref[pl.ds(t * Bp, Bp), :] = h
        return h, c

    # ---- layer 0: hoisted input projection (one MXU pass over all timesteps) ----
    xp0 = jnp.dot(x_ref[...], wih0_ref[...],
                  preferred_element_type=jnp.float32) + b0_ref[...]
    h0f, c0f = lstm_scan(xp0, whh0_ref, h0_ref[0], c0_ref[0], store_mid=True)

    # TODO(synk): nn.LSTM inter-layer dropout and self.dropout are training-only;
    # treated as identity (inference/eval semantics).

    # ---- layer 1: input projection over the staged layer-0 outputs ----
    xp1 = jnp.dot(mid_ref[...], wih1_ref[...],
                  preferred_element_type=jnp.float32) + b1_ref[...]
    h1f, c1f = lstm_scan(xp1, whh1_ref, h0_ref[1], c0_ref[1], store_mid=False)

    hn_ref[0] = h0f
    hn_ref[1] = h1f
    cn_ref[0] = c0f
    cn_ref[1] = c1f

    # ---- FC + sigmoid on the last-step hidden of the top layer only ----
    logits = jnp.dot(h1f, wfc_ref[...],
                     preferred_element_type=jnp.float32) + bfc_ref[...]
    out_ref[...] = jax.nn.sigmoid(logits)


# ------------------------------ wrapper --------------------------------------------
@jax.jit
def sentiment_forward(params, tokens, hidden):
    """tokens: (B, T) int32, hidden: ((n_layers,B,H), (n_layers,B,H)).
    Returns (out (B,), (h_n, c_n))."""
    h0_all, c0_all = hidden
    B, T = tokens.shape
    Bp = max(8, ((B + 7) // 8) * 8)          # pad batch to sublane height
    pad = Bp - B

    # Embedding gather — data-dependent gather kept as plain-JAX glue.
    embeds = jnp.take(params["embedding"], tokens, axis=0)        # (B, T, E)
    x = jnp.transpose(embeds, (1, 0, 2))                          # (T, B, E) time-major
    x = jnp.pad(x, ((0, 0), (0, pad), (0, 0)))                    # (T, Bp, E)
    x = x.reshape(T * Bp, EMBEDDING_DIM)                          # (T*Bp, E)

    h0 = jnp.pad(h0_all, ((0, 0), (0, pad), (0, 0)))              # (L, Bp, H)
    c0 = jnp.pad(c0_all, ((0, 0), (0, pad), (0, 0)))

    # Pre-transposed weights / combined biases (layout plumbing in the wrapper).
    wih0 = params["w_ih_0"].T                                     # (E, 4H)
    whh0 = params["w_hh_0"].T                                     # (H, 4H)
    b0 = (params["b_ih_0"] + params["b_hh_0"]).reshape(1, -1)     # (1, 4H)
    wih1 = params["w_ih_1"].T
    whh1 = params["w_hh_1"].T
    b1 = (params["b_ih_1"] + params["b_hh_1"]).reshape(1, -1)
    wfc = params["w_fc"].T                                        # (H, O)
    bfc = params["b_fc"].reshape(1, -1)                           # (1, O)

    out_p, hn_p, cn_p = pl.pallas_call(
        sentiment_fused_kernel,
        out_shape=(
            jax.ShapeDtypeStruct((Bp, OUTPUT_SIZE), jnp.float32),
            jax.ShapeDtypeStruct((N_LAYERS, Bp, HIDDEN_DIM), jnp.float32),
            jax.ShapeDtypeStruct((N_LAYERS, Bp, HIDDEN_DIM), jnp.float32),
        ),
        scratch_shapes=[pltpu.VMEM((T * Bp, HIDDEN_DIM), jnp.float32)],
    )(x, wih0, whh0, b0, wih1, whh1, b1, wfc, bfc, h0, c0)

    out = out_p[:B, 0]                                            # (B,)
    return out, (hn_p[:, :B, :], cn_p[:, :B, :])


# ------------------------------ params ----------------------------------------------
def init_params(key):
    """Deterministic PyTorch-style uniform(-1/sqrt(H), 1/sqrt(H)) init."""
    params = {}
    k = 1.0 / np.sqrt(HIDDEN_DIM)
    keys = jax.random.split(key, 2 + 4 * N_LAYERS + 2)
    ki = iter(keys)
    params["embedding"] = jax.random.normal(next(ki), (VOCAB_SIZE, EMBEDDING_DIM),
                                            jnp.float32) * 0.1
    for layer in range(N_LAYERS):
        in_dim = EMBEDDING_DIM if layer == 0 else HIDDEN_DIM
        params[f"w_ih_{layer}"] = jax.random.uniform(
            next(ki), (4 * HIDDEN_DIM, in_dim), jnp.float32, -k, k)
        params[f"w_hh_{layer}"] = jax.random.uniform(
            next(ki), (4 * HIDDEN_DIM, HIDDEN_DIM), jnp.float32, -k, k)
        params[f"b_ih_{layer}"] = jax.random.uniform(
            next(ki), (4 * HIDDEN_DIM,), jnp.float32, -k, k)
        params[f"b_hh_{layer}"] = jax.random.uniform(
            next(ki), (4 * HIDDEN_DIM,), jnp.float32, -k, k)
    params["w_fc"] = jax.random.uniform(next(ki), (OUTPUT_SIZE, HIDDEN_DIM),
                                        jnp.float32, -k, k)
    params["b_fc"] = jax.random.uniform(next(ki), (OUTPUT_SIZE,), jnp.float32, -k, k)
    return params


# ------------------------------ reference (pure JAX) ------------------------------
def reference_forward(params, tokens, hidden):
    h0_all, c0_all = hidden
    B, T = tokens.shape
    x = jnp.take(params["embedding"], tokens, axis=0)           # (B, T, E)
    h_finals, c_finals = [], []
    for layer in range(N_LAYERS):
        w_ih = params[f"w_ih_{layer}"]
        w_hh = params[f"w_hh_{layer}"]
        b = params[f"b_ih_{layer}"] + params[f"b_hh_{layer}"]
        h, c = h0_all[layer], c0_all[layer]
        outs = []
        for t in range(T):
            gates = x[:, t, :] @ w_ih.T + h @ w_hh.T + b
            i = jax.nn.sigmoid(gates[:, 0 * HIDDEN_DIM:1 * HIDDEN_DIM])
            f = jax.nn.sigmoid(gates[:, 1 * HIDDEN_DIM:2 * HIDDEN_DIM])
            g = jnp.tanh(gates[:, 2 * HIDDEN_DIM:3 * HIDDEN_DIM])
            o = jax.nn.sigmoid(gates[:, 3 * HIDDEN_DIM:4 * HIDDEN_DIM])
            c = f * c + i * g
            h = o * jnp.tanh(c)
            outs.append(h)
        x = jnp.stack(outs, axis=1)                             # (B, T, H)
        h_finals.append(h)
        c_finals.append(c)
    flat = x.reshape(-1, HIDDEN_DIM)
    out = jax.nn.sigmoid(flat @ params["w_fc"].T + params["b_fc"])
    out = out.reshape(B, -1)[:, -1]
    return out, (jnp.stack(h_finals), jnp.stack(c_finals))


# ----------------------------------- main ------------------------------------------
if __name__ == "__main__":
    key = jax.random.PRNGKey(0)
    k_par, k_tok = jax.random.split(key)
    params = init_params(k_par)

    tokens = jax.random.randint(k_tok, (BATCH, SEQ), 0, VOCAB_SIZE, dtype=jnp.int32)
    hidden = (jnp.zeros((N_LAYERS, BATCH, HIDDEN_DIM), jnp.float32),
              jnp.zeros((N_LAYERS, BATCH, HIDDEN_DIM), jnp.float32))

    out, (h_n, c_n) = sentiment_forward(params, tokens, hidden)
    jax.block_until_ready(out)
    jax.block_until_ready(h_n)
    jax.block_until_ready(c_n)

    ref_out, (ref_h, ref_c) = reference_forward(params, tokens, hidden)
    np.testing.assert_allclose(np.asarray(out), np.asarray(ref_out), atol=1e-4, rtol=1e-4)
    np.testing.assert_allclose(np.asarray(h_n), np.asarray(ref_h), atol=1e-4, rtol=1e-4)
    np.testing.assert_allclose(np.asarray(c_n), np.asarray(ref_c), atol=1e-4, rtol=1e-4)

    print("KERNEL_OK")
</pallas_src>

<mosaic_0001>
module attributes {stable_mosaic.version = 11 : i64} {
  func.func @sentiment_fused_kernel(%arg0: memref<64x32xf32, #tpu.memory_space<vmem>>, %arg1: memref<32x128xf32, #tpu.memory_space<vmem>>, %arg2: memref<32x128xf32, #tpu.memory_space<vmem>>, %arg3: memref<1x128xf32, #tpu.memory_space<vmem>>, %arg4: memref<32x128xf32, #tpu.memory_space<vmem>>, %arg5: memref<32x128xf32, #tpu.memory_space<vmem>>, %arg6: memref<1x128xf32, #tpu.memory_space<vmem>>, %arg7: memref<32x1xf32, #tpu.memory_space<vmem>>, %arg8: memref<1x1xf32, #tpu.memory_space<vmem>>, %arg9: memref<2x8x32xf32, #tpu.memory_space<vmem>>, %arg10: memref<2x8x32xf32, #tpu.memory_space<vmem>>, %arg11: memref<8x1xf32, #tpu.memory_space<vmem>>, %arg12: memref<2x8x32xf32, #tpu.memory_space<vmem>>, %arg13: memref<2x8x32xf32, #tpu.memory_space<vmem>>, %arg14: memref<64x32xf32, #tpu.memory_space<vmem>>) attributes {dimension_semantics = [], scalar_prefetch = 0 : i64, scratch_operands = 1 : i64, tpu.core_type = #tpu.core_type<tc>} {
    %c0 = arith.constant 0 : index
    %c0_0 = arith.constant 0 : index
    %0 = vector.load %arg0[%c0, %c0_0] : memref<64x32xf32, #tpu.memory_space<vmem>>, vector<64x32xf32>
    %c0_1 = arith.constant 0 : index
    %c0_2 = arith.constant 0 : index
    %1 = vector.load %arg1[%c0_1, %c0_2] : memref<32x128xf32, #tpu.memory_space<vmem>>, vector<32x128xf32>
    %cst = arith.constant dense<0.000000e+00> : vector<64x128xf32>
    %2 = tpu.matmul %0, %1, %cst {dimension_numbers = #tpu.dot_dimension_numbers<[1], [0], [0], [1], [0, 0, 1, 1], [], []>} : vector<64x32xf32>, vector<32x128xf32>, vector<64x128xf32> -> vector<64x128xf32>
    %c0_3 = arith.constant 0 : index
    %c0_4 = arith.constant 0 : index
    %3 = vector.load %arg3[%c0_3, %c0_4] : memref<1x128xf32, #tpu.memory_space<vmem>>, vector<1x128xf32>
    %4 = vector.broadcast %3 : vector<1x128xf32> to vector<64x128xf32>
    %5 = arith.addf %2, %4 : vector<64x128xf32>
    %c0_5 = arith.constant 0 : index
    %c0_6 = arith.constant 0 : index
    %c0_7 = arith.constant 0 : index
    %6 = vector.load %arg9[%c0_5, %c0_6, %c0_7] : memref<2x8x32xf32, #tpu.memory_space<vmem>>, vector<1x8x32xf32>
    %7 = vector.shape_cast %6 : vector<1x8x32xf32> to vector<8x32xf32>
    %c0_8 = arith.constant 0 : index
    %c0_9 = arith.constant 0 : index
    %c0_10 = arith.constant 0 : index
    %8 = vector.load %arg10[%c0_8, %c0_9, %c0_10] : memref<2x8x32xf32, #tpu.memory_space<vmem>>, vector<1x8x32xf32>
    %9 = vector.shape_cast %8 : vector<1x8x32xf32> to vector<8x32xf32>
    %c0_11 = arith.constant 0 : index
    %c0_12 = arith.constant 0 : index
    %10 = vector.load %arg2[%c0_11, %c0_12] : memref<32x128xf32, #tpu.memory_space<vmem>>, vector<32x128xf32>
    %11 = vector.extract_strided_slice %5 {offsets = [0, 0], sizes = [8, 128], strides = [1, 1]} : vector<64x128xf32> to vector<8x128xf32>
    %cst_13 = arith.constant dense<0.000000e+00> : vector<8x128xf32>
    %12 = tpu.matmul %7, %10, %cst_13 {dimension_numbers = #tpu.dot_dimension_numbers<[1], [0], [0], [1], [0, 0, 1, 1], [], []>} : vector<8x32xf32>, vector<32x128xf32>, vector<8x128xf32> -> vector<8x128xf32>
    %13 = arith.addf %11, %12 : vector<8x128xf32>
    %14 = vector.extract_strided_slice %13 {offsets = [0, 0], sizes = [8, 32], strides = [1, 1]} : vector<8x128xf32> to vector<8x32xf32>
    %15 = arith.negf %14 : vector<8x32xf32>
    %16 = math.exp %15 : vector<8x32xf32>
    %cst_14 = arith.constant 1.000000e+00 : f32
    %17 = vector.broadcast %cst_14 : f32 to vector<8x32xf32>
    %18 = arith.addf %17, %16 : vector<8x32xf32>
    %19 = arith.divf %17, %18 : vector<8x32xf32>
    %20 = vector.extract_strided_slice %13 {offsets = [0, 32], sizes = [8, 32], strides = [1, 1]} : vector<8x128xf32> to vector<8x32xf32>
    %21 = arith.negf %20 : vector<8x32xf32>
    %22 = math.exp %21 : vector<8x32xf32>
    %cst_15 = arith.constant 1.000000e+00 : f32
    %23 = vector.broadcast %cst_15 : f32 to vector<8x32xf32>
    %24 = arith.addf %23, %22 : vector<8x32xf32>
    %25 = arith.divf %23, %24 : vector<8x32xf32>
    %26 = vector.extract_strided_slice %13 {offsets = [0, 64], sizes = [8, 32], strides = [1, 1]} : vector<8x128xf32> to vector<8x32xf32>
    %27 = math.tanh %26 : vector<8x32xf32>
    %28 = vector.extract_strided_slice %13 {offsets = [0, 96], sizes = [8, 32], strides = [1, 1]} : vector<8x128xf32> to vector<8x32xf32>
    %29 = arith.negf %28 : vector<8x32xf32>
    %30 = math.exp %29 : vector<8x32xf32>
    %cst_16 = arith.constant 1.000000e+00 : f32
    %31 = vector.broadcast %cst_16 : f32 to vector<8x32xf32>
    %32 = arith.addf %31, %30 : vector<8x32xf32>
    %33 = arith.divf %31, %32 : vector<8x32xf32>
    %34 = arith.mulf %25, %9 : vector<8x32xf32>
    %35 = arith.mulf %19, %27 : vector<8x32xf32>
    %36 = arith.addf %34, %35 : vector<8x32xf32>
    %37 = math.tanh %36 : vector<8x32xf32>
    %38 = arith.mulf %33, %37 : vector<8x32xf32>
    %c0_17 = arith.constant 0 : index
    %c0_18 = arith.constant 0 : index
    %39 = vector.load %arg14[%c0_17, %c0_18] : memref<64x32xf32, #tpu.memory_space<vmem>>, vector<8x32xf32>
    tpu.vector_store %arg14[%c0_17, %c0_18], %38 {strides = array<i32>} : memref<64x32xf32, #tpu.memory_space<vmem>>, vector<8x32xf32>,
    %40 = vector.extract_strided_slice %5 {offsets = [8, 0], sizes = [8, 128], strides = [1, 1]} : vector<64x128xf32> to vector<8x128xf32>
    %cst_19 = arith.constant dense<0.000000e+00> : vector<8x128xf32>
    %41 = tpu.matmul %38, %10, %cst_19 {dimension_numbers = #tpu.dot_dimension_numbers<[1], [0], [0], [1], [0, 0, 1, 1], [], []>} : vector<8x32xf32>, vector<32x128xf32>, vector<8x128xf32> -> vector<8x128xf32>
    %42 = arith.addf %40, %41 : vector<8x128xf32>
    %43 = vector.extract_strided_slice %42 {offsets = [0, 0], sizes = [8, 32], strides = [1, 1]} : vector<8x128xf32> to vector<8x32xf32>
    %44 = arith.negf %43 : vector<8x32xf32>
    %45 = math.exp %44 : vector<8x32xf32>
    %cst_20 = arith.constant 1.000000e+00 : f32
    %46 = vector.broadcast %cst_20 : f32 to vector<8x32xf32>
    %47 = arith.addf %46, %45 : vector<8x32xf32>
    %48 = arith.divf %46, %47 : vector<8x32xf32>
    %49 = vector.extract_strided_slice %42 {offsets = [0, 32], sizes = [8, 32], strides = [1, 1]} : vector<8x128xf32> to vector<8x32xf32>
    %50 = arith.negf %49 : vector<8x32xf32>
    %51 = math.exp %50 : vector<8x32xf32>
    %cst_21 = arith.constant 1.000000e+00 : f32
    %52 = vector.broadcast %cst_21 : f32 to vector<8x32xf32>
    %53 = arith.addf %52, %51 : vector<8x32xf32>
    %54 = arith.divf %52, %53 : vector<8x32xf32>
    %55 = vector.extract_strided_slice %42 {offsets = [0, 64], sizes = [8, 32], strides = [1, 1]} : vector<8x128xf32> to vector<8x32xf32>
    %56 = math.tanh %55 : vector<8x32xf32>
    %57 = vector.extract_strided_slice %42 {offsets = [0, 96], sizes = [8, 32], strides = [1, 1]} : vector<8x128xf32> to vector<8x32xf32>
    %58 = arith.negf %57 : vector<8x32xf32>
    %59 = math.exp %58 : vector<8x32xf32>
    %cst_22 = arith.constant 1.000000e+00 : f32
    %60 = vector.broadcast %cst_22 : f32 to vector<8x32xf32>
    %61 = arith.addf %60, %59 : vector<8x32xf32>
    %62 = arith.divf %60, %61 : vector<8x32xf32>
    %63 = arith.mulf %54, %36 : vector<8x32xf32>
    %64 = arith.mulf %48, %56 : vector<8x32xf32>
    %65 = arith.addf %63, %64 : vector<8x32xf32>
    %66 = math.tanh %65 : vector<8x32xf32>
    %67 = arith.mulf %62, %66 : vector<8x32xf32>
    %c8 = arith.constant 8 : index
    %c0_23 = arith.constant 0 : index
    %68 = vector.load %arg14[%c8, %c0_23] : memref<64x32xf32, #tpu.memory_space<vmem>>, vector<8x32xf32>
    tpu.vector_store %arg14[%c8, %c0_23], %67 {strides = array<i32>} : memref<64x32xf32, #tpu.memory_space<vmem>>, vector<8x32xf32>,
    %69 = vector.extract_strided_slice %5 {offsets = [16, 0], sizes = [8, 128], strides = [1, 1]} : vector<64x128xf32> to vector<8x128xf32>
    %cst_24 = arith.constant dense<0.000000e+00> : vector<8x128xf32>
    %70 = tpu.matmul %67, %10, %cst_24 {dimension_numbers = #tpu.dot_dimension_numbers<[1], [0], [0], [1], [0, 0, 1, 1], [], []>} : vector<8x32xf32>, vector<32x128xf32>, vector<8x128xf32> -> vector<8x128xf32>
    %71 = arith.addf %69, %70 : vector<8x128xf32>
    %72 = vector.extract_strided_slice %71 {offsets = [0, 0], sizes = [8, 32], strides = [1, 1]} : vector<8x128xf32> to vector<8x32xf32>
    %73 = arith.negf %72 : vector<8x32xf32>
    %74 = math.exp %73 : vector<8x32xf32>
    %cst_25 = arith.constant 1.000000e+00 : f32
    %75 = vector.broadcast %cst_25 : f32 to vector<8x32xf32>
    %76 = arith.addf %75, %74 : vector<8x32xf32>
    %77 = arith.divf %75, %76 : vector<8x32xf32>
    %78 = vector.extract_strided_slice %71 {offsets = [0, 32], sizes = [8, 32], strides = [1, 1]} : vector<8x128xf32> to vector<8x32xf32>
    %79 = arith.negf %78 : vector<8x32xf32>
    %80 = math.exp %79 : vector<8x32xf32>
    %cst_26 = arith.constant 1.000000e+00 : f32
    %81 = vector.broadcast %cst_26 : f32 to vector<8x32xf32>
    %82 = arith.addf %81, %80 : vector<8x32xf32>
    %83 = arith.divf %81, %82 : vector<8x32xf32>
    %84 = vector.extract_strided_slice %71 {offsets = [0, 64], sizes = [8, 32], strides = [1, 1]} : vector<8x128xf32> to vector<8x32xf32>
    %85 = math.tanh %84 : vector<8x32xf32>
    %86 = vector.extract_strided_slice %71 {offsets = [0, 96], sizes = [8, 32], strides = [1, 1]} : vector<8x128xf32> to vector<8x32xf32>
    %87 = arith.negf %86 : vector<8x32xf32>
    %88 = math.exp %87 : vector<8x32xf32>
    %cst_27 = arith.constant 1.000000e+00 : f32
    %89 = vector.broadcast %cst_27 : f32 to vector<8x32xf32>
    %90 = arith.addf %89, %88 : vector<8x32xf32>
    %91 = arith.divf %89, %90 : vector<8x32xf32>
    %92 = arith.mulf %83, %65 : vector<8x32xf32>
    %93 = arith.mulf %77, %85 : vector<8x32xf32>
    %94 = arith.addf %92, %93 : vector<8x32xf32>
    %95 = math.tanh %94 : vector<8x32xf32>
    %96 = arith.mulf %91, %95 : vector<8x32xf32>
    %c16 = arith.constant 16 : index
    %c0_28 = arith.constant 0 : index
    %97 = vector.load %arg14[%c16, %c0_28] : memref<64x32xf32, #tpu.memory_space<vmem>>, vector<8x32xf32>
    tpu.vector_store %arg14[%c16, %c0_28], %96 {strides = array<i32>} : memref<64x32xf32, #tpu.memory_space<vmem>>, vector<8x32xf32>,
    %98 = vector.extract_strided_slice %5 {offsets = [24, 0], sizes = [8, 128], strides = [1, 1]} : vector<64x128xf32> to vector<8x128xf32>
    %cst_29 = arith.constant dense<0.000000e+00> : vector<8x128xf32>
    %99 = tpu.matmul %96, %10, %cst_29 {dimension_numbers = #tpu.dot_dimension_numbers<[1], [0], [0], [1], [0, 0, 1, 1], [], []>} : vector<8x32xf32>, vector<32x128xf32>, vector<8x128xf32> -> vector<8x128xf32>
    %100 = arith.addf %98, %99 : vector<8x128xf32>
    %101 = vector.extract_strided_slice %100 {offsets = [0, 0], sizes = [8, 32], strides = [1, 1]} : vector<8x128xf32> to vector<8x32xf32>
    %102 = arith.negf %101 : vector<8x32xf32>
    %103 = math.exp %102 : vector<8x32xf32>
    %cst_30 = arith.constant 1.000000e+00 : f32
    %104 = vector.broadcast %cst_30 : f32 to vector<8x32xf32>
    %105 = arith.addf %104, %103 : vector<8x32xf32>
    %106 = arith.divf %104, %105 : vector<8x32xf32>
    %107 = vector.extract_strided_slice %100 {offsets = [0, 32], sizes = [8, 32], strides = [1, 1]} : vector<8x128xf32> to vector<8x32xf32>
    %108 = arith.negf %107 : vector<8x32xf32>
    %109 = math.exp %108 : vector<8x32xf32>
    %cst_31 = arith.constant 1.000000e+00 : f32
    %110 = vector.broadcast %cst_31 : f32 to vector<8x32xf32>
    %111 = arith.addf %110, %109 : vector<8x32xf32>
    %112 = arith.divf %110, %111 : vector<8x32xf32>
    %113 = vector.extract_strided_slice %100 {offsets = [0, 64], sizes = [8, 32], strides = [1, 1]} : vector<8x128xf32> to vector<8x32xf32>
    %114 = math.tanh %113 : vector<8x32xf32>
    %115 = vector.extract_strided_slice %100 {offsets = [0, 96], sizes = [8, 32], strides = [1, 1]} : vector<8x128xf32> to vector<8x32xf32>
    %116 = arith.negf %115 : vector<8x32xf32>
    %117 = math.exp %116 : vector<8x32xf32>
    %cst_32 = arith.constant 1.000000e+00 : f32
    %118 = vector.broadcast %cst_32 : f32 to vector<8x32xf32>
    %119 = arith.addf %118, %117 : vector<8x32xf32>
    %120 = arith.divf %118, %119 : vector<8x32xf32>
    %121 = arith.mulf %112, %94 : vector<8x32xf32>
    %122 = arith.mulf %106, %114 : vector<8x32xf32>
    %123 = arith.addf %121, %122 : vector<8x32xf32>
    %124 = math.tanh %123 : vector<8x32xf32>
    %125 = arith.mulf %120, %124 : vector<8x32xf32>
    %c24 = arith.constant 24 : index
    %c0_33 = arith.constant 0 : index
    %126 = vector.load %arg14[%c24, %c0_33] : memref<64x32xf32, #tpu.memory_space<vmem>>, vector<8x32xf32>
    tpu.vector_store %arg14[%c24, %c0_33], %125 {strides = array<i32>} : memref<64x32xf32, #tpu.memory_space<vmem>>, vector<8x32xf32>,
    %127 = vector.extract_strided_slice %5 {offsets = [32, 0], sizes = [8, 128], strides = [1, 1]} : vector<64x128xf32> to vector<8x128xf32>
    %cst_34 = arith.constant dense<0.000000e+00> : vector<8x128xf32>
    %128 = tpu.matmul %125, %10, %cst_34 {dimension_numbers = #tpu.dot_dimension_numbers<[1], [0], [0], [1], [0, 0, 1, 1], [], []>} : vector<8x32xf32>, vector<32x128xf32>, vector<8x128xf32> -> vector<8x128xf32>
    %129 = arith.addf %127, %128 : vector<8x128xf32>
    %130 = vector.extract_strided_slice %129 {offsets = [0, 0], sizes = [8, 32], strides = [1, 1]} : vector<8x128xf32> to vector<8x32xf32>
    %131 = arith.negf %130 : vector<8x32xf32>
    %132 = math.exp %131 : vector<8x32xf32>
    %cst_35 = arith.constant 1.000000e+00 : f32
    %133 = vector.broadcast %cst_35 : f32 to vector<8x32xf32>
    %134 = arith.addf %133, %132 : vector<8x32xf32>
    %135 = arith.divf %133, %134 : vector<8x32xf32>
    %136 = vector.extract_strided_slice %129 {offsets = [0, 32], sizes = [8, 32], strides = [1, 1]} : vector<8x128xf32> to vector<8x32xf32>
    %137 = arith.negf %136 : vector<8x32xf32>
    %138 = math.exp %137 : vector<8x32xf32>
    %cst_36 = arith.constant 1.000000e+00 : f32
    %139 = vector.broadcast %cst_36 : f32 to vector<8x32xf32>
    %140 = arith.addf %139, %138 : vector<8x32xf32>
    %141 = arith.divf %139, %140 : vector<8x32xf32>
    %142 = vector.extract_strided_slice %129 {offsets = [0, 64], sizes = [8, 32], strides = [1, 1]} : vector<8x128xf32> to vector<8x32xf32>
    %143 = math.tanh %142 : vector<8x32xf32>
    %144 = vector.extract_strided_slice %129 {offsets = [0, 96], sizes = [8, 32], strides = [1, 1]} : vector<8x128xf32> to vector<8x32xf32>
    %145 = arith.negf %144 : vector<8x32xf32>
    %146 = math.exp %145 : vector<8x32xf32>
    %cst_37 = arith.constant 1.000000e+00 : f32
    %147 = vector.broadcast %cst_37 : f32 to vector<8x32xf32>
    %148 = arith.addf %147, %146 : vector<8x32xf32>
    %149 = arith.divf %147, %148 : vector<8x32xf32>
    %150 = arith.mulf %141, %123 : vector<8x32xf32>
    %151 = arith.mulf %135, %143 : vector<8x32xf32>
    %152 = arith.addf %150, %151 : vector<8x32xf32>
    %153 = math.tanh %152 : vector<8x32xf32>
    %154 = arith.mulf %149, %153 : vector<8x32xf32>
    %c32 = arith.constant 32 : index
    %c0_38 = arith.constant 0 : index
    %155 = vector.load %arg14[%c32, %c0_38] : memref<64x32xf32, #tpu.memory_space<vmem>>, vector<8x32xf32>
    tpu.vector_store %arg14[%c32, %c0_38], %154 {strides = array<i32>} : memref<64x32xf32, #tpu.memory_space<vmem>>, vector<8x32xf32>,
    %156 = vector.extract_strided_slice %5 {offsets = [40, 0], sizes = [8, 128], strides = [1, 1]} : vector<64x128xf32> to vector<8x128xf32>
    %cst_39 = arith.constant dense<0.000000e+00> : vector<8x128xf32>
    %157 = tpu.matmul %154, %10, %cst_39 {dimension_numbers = #tpu.dot_dimension_numbers<[1], [0], [0], [1], [0, 0, 1, 1], [], []>} : vector<8x32xf32>, vector<32x128xf32>, vector<8x128xf32> -> vector<8x128xf32>
    %158 = arith.addf %156, %157 : vector<8x128xf32>
    %159 = vector.extract_strided_slice %158 {offsets = [0, 0], sizes = [8, 32], strides = [1, 1]} : vector<8x128xf32> to vector<8x32xf32>
    %160 = arith.negf %159 : vector<8x32xf32>
    %161 = math.exp %160 : vector<8x32xf32>
    %cst_40 = arith.constant 1.000000e+00 : f32
    %162 = vector.broadcast %cst_40 : f32 to vector<8x32xf32>
    %163 = arith.addf %162, %161 : vector<8x32xf32>
    %164 = arith.divf %162, %163 : vector<8x32xf32>
    %165 = vector.extract_strided_slice %158 {offsets = [0, 32], sizes = [8, 32], strides = [1, 1]} : vector<8x128xf32> to vector<8x32xf32>
    %166 = arith.negf %165 : vector<8x32xf32>
    %167 = math.exp %166 : vector<8x32xf32>
    %cst_41 = arith.constant 1.000000e+00 : f32
    %168 = vector.broadcast %cst_41 : f32 to vector<8x32xf32>
    %169 = arith.addf %168, %167 : vector<8x32xf32>
    %170 = arith.divf %168, %169 : vector<8x32xf32>
    %171 = vector.extract_strided_slice %158 {offsets = [0, 64], sizes = [8, 32], strides = [1, 1]} : vector<8x128xf32> to vector<8x32xf32>
    %172 = math.tanh %171 : vector<8x32xf32>
    %173 = vector.extract_strided_slice %158 {offsets = [0, 96], sizes = [8, 32], strides = [1, 1]} : vector<8x128xf32> to vector<8x32xf32>
    %174 = arith.negf %173 : vector<8x32xf32>
    %175 = math.exp %174 : vector<8x32xf32>
    %cst_42 = arith.constant 1.000000e+00 : f32
    %176 = vector.broadcast %cst_42 : f32 to vector<8x32xf32>
    %177 = arith.addf %176, %175 : vector<8x32xf32>
    %178 = arith.divf %176, %177 : vector<8x32xf32>
    %179 = arith.mulf %170, %152 : vector<8x32xf32>
    %180 = arith.mulf %164, %172 : vector<8x32xf32>
    %181 = arith.addf %179, %180 : vector<8x32xf32>
    %182 = math.tanh %181 : vector<8x32xf32>
    %183 = arith.mulf %178, %182 : vector<8x32xf32>
    %c40 = arith.constant 40 : index
    %c0_43 = arith.constant 0 : index
    %184 = vector.load %arg14[%c40, %c0_43] : memref<64x32xf32, #tpu.memory_space<vmem>>, vector<8x32xf32>
    tpu.vector_store %arg14[%c40, %c0_43], %183 {strides = array<i32>} : memref<64x32xf32, #tpu.memory_space<vmem>>, vector<8x32xf32>,
    %185 = vector.extract_strided_slice %5 {offsets = [48, 0], sizes = [8, 128], strides = [1, 1]} : vector<64x128xf32> to vector<8x128xf32>
    %cst_44 = arith.constant dense<0.000000e+00> : vector<8x128xf32>
    %186 = tpu.matmul %183, %10, %cst_44 {dimension_numbers = #tpu.dot_dimension_numbers<[1], [0], [0], [1], [0, 0, 1, 1], [], []>} : vector<8x32xf32>, vector<32x128xf32>, vector<8x128xf32> -> vector<8x128xf32>
    %187 = arith.addf %185, %186 : vector<8x128xf32>
    %188 = vector.extract_strided_slice %187 {offsets = [0, 0], sizes = [8, 32], strides = [1, 1]} : vector<8x128xf32> to vector<8x32xf32>
    %189 = arith.negf %188 : vector<8x32xf32>
    %190 = math.exp %189 : vector<8x32xf32>
    %cst_45 = arith.constant 1.000000e+00 : f32
    %191 = vector.broadcast %cst_45 : f32 to vector<8x32xf32>
    %192 = arith.addf %191, %190 : vector<8x32xf32>
    %193 = arith.divf %191, %192 : vector<8x32xf32>
    %194 = vector.extract_strided_slice %187 {offsets = [0, 32], sizes = [8, 32], strides = [1, 1]} : vector<8x128xf32> to vector<8x32xf32>
    %195 = arith.negf %194 : vector<8x32xf32>
    %196 = math.exp %195 : vector<8x32xf32>
    %cst_46 = arith.constant 1.000000e+00 : f32
    %197 = vector.broadcast %cst_46 : f32 to vector<8x32xf32>
    %198 = arith.addf %197, %196 : vector<8x32xf32>
    %199 = arith.divf %197, %198 : vector<8x32xf32>
    %200 = vector.extract_strided_slice %187 {offsets = [0, 64], sizes = [8, 32], strides = [1, 1]} : vector<8x128xf32> to vector<8x32xf32>
    %201 = math.tanh %200 : vector<8x32xf32>
    %202 = vector.extract_strided_slice %187 {offsets = [0, 96], sizes = [8, 32], strides = [1, 1]} : vector<8x128xf32> to vector<8x32xf32>
    %203 = arith.negf %202 : vector<8x32xf32>
    %204 = math.exp %203 : vector<8x32xf32>
    %cst_47 = arith.constant 1.000000e+00 : f32
    %205 = vector.broadcast %cst_47 : f32 to vector<8x32xf32>
    %206 = arith.addf %205, %204 : vector<8x32xf32>
    %207 = arith.divf %205, %206 : vector<8x32xf32>
    %208 = arith.mulf %199, %181 : vector<8x32xf32>
    %209 = arith.mulf %193, %201 : vector<8x32xf32>
    %210 = arith.addf %208, %209 : vector<8x32xf32>
    %211 = math.tanh %210 : vector<8x32xf32>
    %212 = arith.mulf %207, %211 : vector<8x32xf32>
    %c48 = arith.constant 48 : index
    %c0_48 = arith.constant 0 : index
    %213 = vector.load %arg14[%c48, %c0_48] : memref<64x32xf32, #tpu.memory_space<vmem>>, vector<8x32xf32>
    tpu.vector_store %arg14[%c48, %c0_48], %212 {strides = array<i32>} : memref<64x32xf32, #tpu.memory_space<vmem>>, vector<8x32xf32>,
    %214 = vector.extract_strided_slice %5 {offsets = [56, 0], sizes = [8, 128], strides = [1, 1]} : vector<64x128xf32> to vector<8x128xf32>
    %cst_49 = arith.constant dense<0.000000e+00> : vector<8x128xf32>
    %215 = tpu.matmul %212, %10, %cst_49 {dimension_numbers = #tpu.dot_dimension_numbers<[1], [0], [0], [1], [0, 0, 1, 1], [], []>} : vector<8x32xf32>, vector<32x128xf32>, vector<8x128xf32> -> vector<8x128xf32>
    %216 = arith.addf %214, %215 : vector<8x128xf32>
    %217 = vector.extract_strided_slice %216 {offsets = [0, 0], sizes = [8, 32], strides = [1, 1]} : vector<8x128xf32> to vector<8x32xf32>
    %218 = arith.negf %217 : vector<8x32xf32>
    %219 = math.exp %218 : vector<8x32xf32>
    %cst_50 = arith.constant 1.000000e+00 : f32
    %220 = vector.broadcast %cst_50 : f32 to vector<8x32xf32>
    %221 = arith.addf %220, %219 : vector<8x32xf32>
    %222 = arith.divf %220, %221 : vector<8x32xf32>
    %223 = vector.extract_strided_slice %216 {offsets = [0, 32], sizes = [8, 32], strides = [1, 1]} : vector<8x128xf32> to vector<8x32xf32>
    %224 = arith.negf %223 : vector<8x32xf32>
    %225 = math.exp %224 : vector<8x32xf32>
    %cst_51 = arith.constant 1.000000e+00 : f32
    %226 = vector.broadcast %cst_51 : f32 to vector<8x32xf32>
    %227 = arith.addf %226, %225 : vector<8x32xf32>
    %228 = arith.divf %226, %227 : vector<8x32xf32>
    %229 = vector.extract_strided_slice %216 {offsets = [0, 64], sizes = [8, 32], strides = [1, 1]} : vector<8x128xf32> to vector<8x32xf32>
    %230 = math.tanh %229 : vector<8x32xf32>
    %231 = vector.extract_strided_slice %216 {offsets = [0, 96], sizes = [8, 32], strides = [1, 1]} : vector<8x128xf32> to vector<8x32xf32>
    %232 = arith.negf %231 : vector<8x32xf32>
    %233 = math.exp %232 : vector<8x32xf32>
    %cst_52 = arith.constant 1.000000e+00 : f32
    %234 = vector.broadcast %cst_52 : f32 to vector<8x32xf32>
    %235 = arith.addf %234, %233 : vector<8x32xf32>
    %236 = arith.divf %234, %235 : vector<8x32xf32>
    %237 = arith.mulf %228, %210 : vector<8x32xf32>
    %238 = arith.mulf %222, %230 : vector<8x32xf32>
    %239 = arith.addf %237, %238 : vector<8x32xf32>
    %240 = math.tanh %239 : vector<8x32xf32>
    %241 = arith.mulf %236, %240 : vector<8x32xf32>
    %c56 = arith.constant 56 : index
    %c0_53 = arith.constant 0 : index
    %242 = vector.load %arg14[%c56, %c0_53] : memref<64x32xf32, #tpu.memory_space<vmem>>, vector<8x32xf32>
    tpu.vector_store %arg14[%c56, %c0_53], %241 {strides = array<i32>} : memref<64x32xf32, #tpu.memory_space<vmem>>, vector<8x32xf32>,
    %c0_54 = arith.constant 0 : index
    %c0_55 = arith.constant 0 : index
    %243 = vector.load %arg14[%c0_54, %c0_55] : memref<64x32xf32, #tpu.memory_space<vmem>>, vector<64x32xf32>
    %c0_56 = arith.constant 0 : index
    %c0_57 = arith.constant 0 : index
    %244 = vector.load %arg4[%c0_56, %c0_57] : memref<32x128xf32, #tpu.memory_space<vmem>>, vector<32x128xf32>
    %cst_58 = arith.constant dense<0.000000e+00> : vector<64x128xf32>
    %245 = tpu.matmul %243, %244, %cst_58 {dimension_numbers = #tpu.dot_dimension_numbers<[1], [0], [0], [1], [0, 0, 1, 1], [], []>} : vector<64x32xf32>, vector<32x128xf32>, vector<64x128xf32> -> vector<64x128xf32>
    %c0_59 = arith.constant 0 : index
    %c0_60 = arith.constant 0 : index
    %246 = vector.load %arg6[%c0_59, %c0_60] : memref<1x128xf32, #tpu.memory_space<vmem>>, vector<1x128xf32>
    %247 = vector.broadcast %246 : vector<1x128xf32> to vector<64x128xf32>
    %248 = arith.addf %245, %247 : vector<64x128xf32>
    %c1 = arith.constant 1 : index
    %c0_61 = arith.constant 0 : index
    %c0_62 = arith.constant 0 : index
    %249 = vector.load %arg9[%c1, %c0_61, %c0_62] : memref<2x8x32xf32, #tpu.memory_space<vmem>>, vector<1x8x32xf32>
    %250 = vector.shape_cast %249 : vector<1x8x32xf32> to vector<8x32xf32>
    %c1_63 = arith.constant 1 : index
    %c0_64 = arith.constant 0 : index
    %c0_65 = arith.constant 0 : index
    %251 = vector.load %arg10[%c1_63, %c0_64, %c0_65] : memref<2x8x32xf32, #tpu.memory_space<vmem>>, vector<1x8x32xf32>
    %252 = vector.shape_cast %251 : vector<1x8x32xf32> to vector<8x32xf32>
    %c0_66 = arith.constant 0 : index
    %c0_67 = arith.constant 0 : index
    %253 = vector.load %arg5[%c0_66, %c0_67] : memref<32x128xf32, #tpu.memory_space<vmem>>, vector<32x128xf32>
    %254 = vector.extract_strided_slice %248 {offsets = [0, 0], sizes = [8, 128], strides = [1, 1]} : vector<64x128xf32> to vector<8x128xf32>
    %cst_68 = arith.constant dense<0.000000e+00> : vector<8x128xf32>
    %255 = tpu.matmul %250, %253, %cst_68 {dimension_numbers = #tpu.dot_dimension_numbers<[1], [0], [0], [1], [0, 0, 1, 1], [], []>} : vector<8x32xf32>, vector<32x128xf32>, vector<8x128xf32> -> vector<8x128xf32>
    %256 = arith.addf %254, %255 : vector<8x128xf32>
    %257 = vector.extract_strided_slice %256 {offsets = [0, 0], sizes = [8, 32], strides = [1, 1]} : vector<8x128xf32> to vector<8x32xf32>
    %258 = arith.negf %257 : vector<8x32xf32>
    %259 = math.exp %258 : vector<8x32xf32>
    %cst_69 = arith.constant 1.000000e+00 : f32
    %260 = vector.broadcast %cst_69 : f32 to vector<8x32xf32>
    %261 = arith.addf %260, %259 : vector<8x32xf32>
    %262 = arith.divf %260, %261 : vector<8x32xf32>
    %263 = vector.extract_strided_slice %256 {offsets = [0, 32], sizes = [8, 32], strides = [1, 1]} : vector<8x128xf32> to vector<8x32xf32>
    %264 = arith.negf %263 : vector<8x32xf32>
    %265 = math.exp %264 : vector<8x32xf32>
    %cst_70 = arith.constant 1.000000e+00 : f32
    %266 = vector.broadcast %cst_70 : f32 to vector<8x32xf32>
    %267 = arith.addf %266, %265 : vector<8x32xf32>
    %268 = arith.divf %266, %267 : vector<8x32xf32>
    %269 = vector.extract_strided_slice %256 {offsets = [0, 64], sizes = [8, 32], strides = [1, 1]} : vector<8x128xf32> to vector<8x32xf32>
    %270 = math.tanh %269 : vector<8x32xf32>
    %271 = vector.extract_strided_slice %256 {offsets = [0, 96], sizes = [8, 32], strides = [1, 1]} : vector<8x128xf32> to vector<8x32xf32>
    %272 = arith.negf %271 : vector<8x32xf32>
    %273 = math.exp %272 : vector<8x32xf32>
    %cst_71 = arith.constant 1.000000e+00 : f32
    %274 = vector.broadcast %cst_71 : f32 to vector<8x32xf32>
    %275 = arith.addf %274, %273 : vector<8x32xf32>
    %276 = arith.divf %274, %275 : vector<8x32xf32>
    %277 = arith.mulf %268, %252 : vector<8x32xf32>
    %278 = arith.mulf %262, %270 : vector<8x32xf32>
    %279 = arith.addf %277, %278 : vector<8x32xf32>
    %280 = math.tanh %279 : vector<8x32xf32>
    %281 = arith.mulf %276, %280 : vector<8x32xf32>
    %282 = vector.extract_strided_slice %248 {offsets = [8, 0], sizes = [8, 128], strides = [1, 1]} : vector<64x128xf32> to vector<8x128xf32>
    %cst_72 = arith.constant dense<0.000000e+00> : vector<8x128xf32>
    %283 = tpu.matmul %281, %253, %cst_72 {dimension_numbers = #tpu.dot_dimension_numbers<[1], [0], [0], [1], [0, 0, 1, 1], [], []>} : vector<8x32xf32>, vector<32x128xf32>, vector<8x128xf32> -> vector<8x128xf32>
    %284 = arith.addf %282, %283 : vector<8x128xf32>
    %285 = vector.extract_strided_slice %284 {offsets = [0, 0], sizes = [8, 32], strides = [1, 1]} : vector<8x128xf32> to vector<8x32xf32>
    %286 = arith.negf %285 : vector<8x32xf32>
    %287 = math.exp %286 : vector<8x32xf32>
    %cst_73 = arith.constant 1.000000e+00 : f32
    %288 = vector.broadcast %cst_73 : f32 to vector<8x32xf32>
    %289 = arith.addf %288, %287 : vector<8x32xf32>
    %290 = arith.divf %288, %289 : vector<8x32xf32>
    %291 = vector.extract_strided_slice %284 {offsets = [0, 32], sizes = [8, 32], strides = [1, 1]} : vector<8x128xf32> to vector<8x32xf32>
    %292 = arith.negf %291 : vector<8x32xf32>
    %293 = math.exp %292 : vector<8x32xf32>
    %cst_74 = arith.constant 1.000000e+00 : f32
    %294 = vector.broadcast %cst_74 : f32 to vector<8x32xf32>
    %295 = arith.addf %294, %293 : vector<8x32xf32>
    %296 = arith.divf %294, %295 : vector<8x32xf32>
    %297 = vector.extract_strided_slice %284 {offsets = [0, 64], sizes = [8, 32], strides = [1, 1]} : vector<8x128xf32> to vector<8x32xf32>
    %298 = math.tanh %297 : vector<8x32xf32>
    %299 = vector.extract_strided_slice %284 {offsets = [0, 96], sizes = [8, 32], strides = [1, 1]} : vector<8x128xf32> to vector<8x32xf32>
    %300 = arith.negf %299 : vector<8x32xf32>
    %301 = math.exp %300 : vector<8x32xf32>
    %cst_75 = arith.constant 1.000000e+00 : f32
    %302 = vector.broadcast %cst_75 : f32 to vector<8x32xf32>
    %303 = arith.addf %302, %301 : vector<8x32xf32>
    %304 = arith.divf %302, %303 : vector<8x32xf32>
    %305 = arith.mulf %296, %279 : vector<8x32xf32>
    %306 = arith.mulf %290, %298 : vector<8x32xf32>
    %307 = arith.addf %305, %306 : vector<8x32xf32>
    %308 = math.tanh %307 : vector<8x32xf32>
    %309 = arith.mulf %304, %308 : vector<8x32xf32>
    %310 = vector.extract_strided_slice %248 {offsets = [16, 0], sizes = [8, 128], strides = [1, 1]} : vector<64x128xf32> to vector<8x128xf32>
    %cst_76 = arith.constant dense<0.000000e+00> : vector<8x128xf32>
    %311 = tpu.matmul %309, %253, %cst_76 {dimension_numbers = #tpu.dot_dimension_numbers<[1], [0], [0], [1], [0, 0, 1, 1], [], []>} : vector<8x32xf32>, vector<32x128xf32>, vector<8x128xf32> -> vector<8x128xf32>
    %312 = arith.addf %310, %311 : vector<8x128xf32>
    %313 = vector.extract_strided_slice %312 {offsets = [0, 0], sizes = [8, 32], strides = [1, 1]} : vector<8x128xf32> to vector<8x32xf32>
    %314 = arith.negf %313 : vector<8x32xf32>
    %315 = math.exp %314 : vector<8x32xf32>
    %cst_77 = arith.constant 1.000000e+00 : f32
    %316 = vector.broadcast %cst_77 : f32 to vector<8x32xf32>
    %317 = arith.addf %316, %315 : vector<8x32xf32>
    %318 = arith.divf %316, %317 : vector<8x32xf32>
    %319 = vector.extract_strided_slice %312 {offsets = [0, 32], sizes = [8, 32], strides = [1, 1]} : vector<8x128xf32> to vector<8x32xf32>
    %320 = arith.negf %319 : vector<8x32xf32>
    %321 = math.exp %320 : vector<8x32xf32>
    %cst_78 = arith.constant 1.000000e+00 : f32
    %322 = vector.broadcast %cst_78 : f32 to vector<8x32xf32>
    %323 = arith.addf %322, %321 : vector<8x32xf32>
    %324 = arith.divf %322, %323 : vector<8x32xf32>
    %325 = vector.extract_strided_slice %312 {offsets = [0, 64], sizes = [8, 32], strides = [1, 1]} : vector<8x128xf32> to vector<8x32xf32>
    %326 = math.tanh %325 : vector<8x32xf32>
    %327 = vector.extract_strided_slice %312 {offsets = [0, 96], sizes = [8, 32], strides = [1, 1]} : vector<8x128xf32> to vector<8x32xf32>
    %328 = arith.negf %327 : vector<8x32xf32>
    %329 = math.exp %328 : vector<8x32xf32>
    %cst_79 = arith.constant 1.000000e+00 : f32
    %330 = vector.broadcast %cst_79 : f32 to vector<8x32xf32>
    %331 = arith.addf %330, %329 : vector<8x32xf32>
    %332 = arith.divf %330, %331 : vector<8x32xf32>
    %333 = arith.mulf %324, %307 : vector<8x32xf32>
    %334 = arith.mulf %318, %326 : vector<8x32xf32>
    %335 = arith.addf %333, %334 : vector<8x32xf32>
    %336 = math.tanh %335 : vector<8x32xf32>
    %337 = arith.mulf %332, %336 : vector<8x32xf32>
    %338 = vector.extract_strided_slice %248 {offsets = [24, 0], sizes = [8, 128], strides = [1, 1]} : vector<64x128xf32> to vector<8x128xf32>
    %cst_80 = arith.constant dense<0.000000e+00> : vector<8x128xf32>
    %339 = tpu.matmul %337, %253, %cst_80 {dimension_numbers = #tpu.dot_dimension_numbers<[1], [0], [0], [1], [0, 0, 1, 1], [], []>} : vector<8x32xf32>, vector<32x128xf32>, vector<8x128xf32> -> vector<8x128xf32>
    %340 = arith.addf %338, %339 : vector<8x128xf32>
    %341 = vector.extract_strided_slice %340 {offsets = [0, 0], sizes = [8, 32], strides = [1, 1]} : vector<8x128xf32> to vector<8x32xf32>
    %342 = arith.negf %341 : vector<8x32xf32>
    %343 = math.exp %342 : vector<8x32xf32>
    %cst_81 = arith.constant 1.000000e+00 : f32
    %344 = vector.broadcast %cst_81 : f32 to vector<8x32xf32>
    %345 = arith.addf %344, %343 : vector<8x32xf32>
    %346 = arith.divf %344, %345 : vector<8x32xf32>
    %347 = vector.extract_strided_slice %340 {offsets = [0, 32], sizes = [8, 32], strides = [1, 1]} : vector<8x128xf32> to vector<8x32xf32>
    %348 = arith.negf %347 : vector<8x32xf32>
    %349 = math.exp %348 : vector<8x32xf32>
    %cst_82 = arith.constant 1.000000e+00 : f32
    %350 = vector.broadcast %cst_82 : f32 to vector<8x32xf32>
    %351 = arith.addf %350, %349 : vector<8x32xf32>
    %352 = arith.divf %350, %351 : vector<8x32xf32>
    %353 = vector.extract_strided_slice %340 {offsets = [0, 64], sizes = [8, 32], strides = [1, 1]} : vector<8x128xf32> to vector<8x32xf32>
    %354 = math.tanh %353 : vector<8x32xf32>
    %355 = vector.extract_strided_slice %340 {offsets = [0, 96], sizes = [8, 32], strides = [1, 1]} : vector<8x128xf32> to vector<8x32xf32>
    %356 = arith.negf %355 : vector<8x32xf32>
    %357 = math.exp %356 : vector<8x32xf32>
    %cst_83 = arith.constant 1.000000e+00 : f32
    %358 = vector.broadcast %cst_83 : f32 to vector<8x32xf32>
    %359 = arith.addf %358, %357 : vector<8x32xf32>
    %360 = arith.divf %358, %359 : vector<8x32xf32>
    %361 = arith.mulf %352, %335 : vector<8x32xf32>
    %362 = arith.mulf %346, %354 : vector<8x32xf32>
    %363 = arith.addf %361, %362 : vector<8x32xf32>
    %364 = math.tanh %363 : vector<8x32xf32>
    %365 = arith.mulf %360, %364 : vector<8x32xf32>
    %366 = vector.extract_strided_slice %248 {offsets = [32, 0], sizes = [8, 128], strides = [1, 1]} : vector<64x128xf32> to vector<8x128xf32>
    %cst_84 = arith.constant dense<0.000000e+00> : vector<8x128xf32>
    %367 = tpu.matmul %365, %253, %cst_84 {dimension_numbers = #tpu.dot_dimension_numbers<[1], [0], [0], [1], [0, 0, 1, 1], [], []>} : vector<8x32xf32>, vector<32x128xf32>, vector<8x128xf32> -> vector<8x128xf32>
    %368 = arith.addf %366, %367 : vector<8x128xf32>
    %369 = vector.extract_strided_slice %368 {offsets = [0, 0], sizes = [8, 32], strides = [1, 1]} : vector<8x128xf32> to vector<8x32xf32>
    %370 = arith.negf %369 : vector<8x32xf32>
    %371 = math.exp %370 : vector<8x32xf32>
    %cst_85 = arith.constant 1.000000e+00 : f32
    %372 = vector.broadcast %cst_85 : f32 to vector<8x32xf32>
    %373 = arith.addf %372, %371 : vector<8x32xf32>
    %374 = arith.divf %372, %373 : vector<8x32xf32>
    %375 = vector.extract_strided_slice %368 {offsets = [0, 32], sizes = [8, 32], strides = [1, 1]} : vector<8x128xf32> to vector<8x32xf32>
    %376 = arith.negf %375 : vector<8x32xf32>
    %377 = math.exp %376 : vector<8x32xf32>
    %cst_86 = arith.constant 1.000000e+00 : f32
    %378 = vector.broadcast %cst_86 : f32 to vector<8x32xf32>
    %379 = arith.addf %378, %377 : vector<8x32xf32>
    %380 = arith.divf %378, %379 : vector<8x32xf32>
    %381 = vector.extract_strided_slice %368 {offsets = [0, 64], sizes = [8, 32], strides = [1, 1]} : vector<8x128xf32> to vector<8x32xf32>
    %382 = math.tanh %381 : vector<8x32xf32>
    %383 = vector.extract_strided_slice %368 {offsets = [0, 96], sizes = [8, 32], strides = [1, 1]} : vector<8x128xf32> to vector<8x32xf32>
    %384 = arith.negf %383 : vector<8x32xf32>
    %385 = math.exp %384 : vector<8x32xf32>
    %cst_87 = arith.constant 1.000000e+00 : f32
    %386 = vector.broadcast %cst_87 : f32 to vector<8x32xf32>
    %387 = arith.addf %386, %385 : vector<8x32xf32>
    %388 = arith.divf %386, %387 : vector<8x32xf32>
    %389 = arith.mulf %380, %363 : vector<8x32xf32>
    %390 = arith.mulf %374, %382 : vector<8x32xf32>
    %391 = arith.addf %389, %390 : vector<8x32xf32>
    %392 = math.tanh %391 : vector<8x32xf32>
    %393 = arith.mulf %388, %392 : vector<8x32xf32>
    %394 = vector.extract_strided_slice %248 {offsets = [40, 0], sizes = [8, 128], strides = [1, 1]} : vector<64x128xf32> to vector<8x128xf32>
    %cst_88 = arith.constant dense<0.000000e+00> : vector<8x128xf32>
    %395 = tpu.matmul %393, %253, %cst_88 {dimension_numbers = #tpu.dot_dimension_numbers<[1], [0], [0], [1], [0, 0, 1, 1], [], []>} : vector<8x32xf32>, vector<32x128xf32>, vector<8x128xf32> -> vector<8x128xf32>
    %396 = arith.addf %394, %395 : vector<8x128xf32>
    %397 = vector.extract_strided_slice %396 {offsets = [0, 0], sizes = [8, 32], strides = [1, 1]} : vector<8x128xf32> to vector<8x32xf32>
    %398 = arith.negf %397 : vector<8x32xf32>
    %399 = math.exp %398 : vector<8x32xf32>
    %cst_89 = arith.constant 1.000000e+00 : f32
    %400 = vector.broadcast %cst_89 : f32 to vector<8x32xf32>
    %401 = arith.addf %400, %399 : vector<8x32xf32>
    %402 = arith.divf %400, %401 : vector<8x32xf32>
    %403 = vector.extract_strided_slice %396 {offsets = [0, 32], sizes = [8, 32], strides = [1, 1]} : vector<8x128xf32> to vector<8x32xf32>
    %404 = arith.negf %403 : vector<8x32xf32>
    %405 = math.exp %404 : vector<8x32xf32>
    %cst_90 = arith.constant 1.000000e+00 : f32
    %406 = vector.broadcast %cst_90 : f32 to vector<8x32xf32>
    %407 = arith.addf %406, %405 : vector<8x32xf32>
    %408 = arith.divf %406, %407 : vector<8x32xf32>
    %409 = vector.extract_strided_slice %396 {offsets = [0, 64], sizes = [8, 32], strides = [1, 1]} : vector<8x128xf32> to vector<8x32xf32>
    %410 = math.tanh %409 : vector<8x32xf32>
    %411 = vector.extract_strided_slice %396 {offsets = [0, 96], sizes = [8, 32], strides = [1, 1]} : vector<8x128xf32> to vector<8x32xf32>
    %412 = arith.negf %411 : vector<8x32xf32>
    %413 = math.exp %412 : vector<8x32xf32>
    %cst_91 = arith.constant 1.000000e+00 : f32
    %414 = vector.broadcast %cst_91 : f32 to vector<8x32xf32>
    %415 = arith.addf %414, %413 : vector<8x32xf32>
    %416 = arith.divf %414, %415 : vector<8x32xf32>
    %417 = arith.mulf %408, %391 : vector<8x32xf32>
    %418 = arith.mulf %402, %410 : vector<8x32xf32>
    %419 = arith.addf %417, %418 : vector<8x32xf32>
    %420 = math.tanh %419 : vector<8x32xf32>
    %421 = arith.mulf %416, %420 : vector<8x32xf32>
    %422 = vector.extract_strided_slice %248 {offsets = [48, 0], sizes = [8, 128], strides = [1, 1]} : vector<64x128xf32> to vector<8x128xf32>
    %cst_92 = arith.constant dense<0.000000e+00> : vector<8x128xf32>
    %423 = tpu.matmul %421, %253, %cst_92 {dimension_numbers = #tpu.dot_dimension_numbers<[1], [0], [0], [1], [0, 0, 1, 1], [], []>} : vector<8x32xf32>, vector<32x128xf32>, vector<8x128xf32> -> vector<8x128xf32>
    %424 = arith.addf %422, %423 : vector<8x128xf32>
    %425 = vector.extract_strided_slice %424 {offsets = [0, 0], sizes = [8, 32], strides = [1, 1]} : vector<8x128xf32> to vector<8x32xf32>
    %426 = arith.negf %425 : vector<8x32xf32>
    %427 = math.exp %426 : vector<8x32xf32>
    %cst_93 = arith.constant 1.000000e+00 : f32
    %428 = vector.broadcast %cst_93 : f32 to vector<8x32xf32>
    %429 = arith.addf %428, %427 : vector<8x32xf32>
    %430 = arith.divf %428, %429 : vector<8x32xf32>
    %431 = vector.extract_strided_slice %424 {offsets = [0, 32], sizes = [8, 32], strides = [1, 1]} : vector<8x128xf32> to vector<8x32xf32>
    %432 = arith.negf %431 : vector<8x32xf32>
    %433 = math.exp %432 : vector<8x32xf32>
    %cst_94 = arith.constant 1.000000e+00 : f32
    %434 = vector.broadcast %cst_94 : f32 to vector<8x32xf32>
    %435 = arith.addf %434, %433 : vector<8x32xf32>
    %436 = arith.divf %434, %435 : vector<8x32xf32>
    %437 = vector.extract_strided_slice %424 {offsets = [0, 64], sizes = [8, 32], strides = [1, 1]} : vector<8x128xf32> to vector<8x32xf32>
    %438 = math.tanh %437 : vector<8x32xf32>
    %439 = vector.extract_strided_slice %424 {offsets = [0, 96], sizes = [8, 32], strides = [1, 1]} : vector<8x128xf32> to vector<8x32xf32>
    %440 = arith.negf %439 : vector<8x32xf32>
    %441 = math.exp %440 : vector<8x32xf32>
    %cst_95 = arith.constant 1.000000e+00 : f32
    %442 = vector.broadcast %cst_95 : f32 to vector<8x32xf32>
    %443 = arith.addf %442, %441 : vector<8x32xf32>
    %444 = arith.divf %442, %443 : vector<8x32xf32>
    %445 = arith.mulf %436, %419 : vector<8x32xf32>
    %446 = arith.mulf %430, %438 : vector<8x32xf32>
    %447 = arith.addf %445, %446 : vector<8x32xf32>
    %448 = math.tanh %447 : vector<8x32xf32>
    %449 = arith.mulf %444, %448 : vector<8x32xf32>
    %450 = vector.extract_strided_slice %248 {offsets = [56, 0], sizes = [8, 128], strides = [1, 1]} : vector<64x128xf32> to vector<8x128xf32>
    %cst_96 = arith.constant dense<0.000000e+00> : vector<8x128xf32>
    %451 = tpu.matmul %449, %253, %cst_96 {dimension_numbers = #tpu.dot_dimension_numbers<[1], [0], [0], [1], [0, 0, 1, 1], [], []>} : vector<8x32xf32>, vector<32x128xf32>, vector<8x128xf32> -> vector<8x128xf32>
    %452 = arith.addf %450, %451 : vector<8x128xf32>
    %453 = vector.extract_strided_slice %452 {offsets = [0, 0], sizes = [8, 32], strides = [1, 1]} : vector<8x128xf32> to vector<8x32xf32>
    %454 = arith.negf %453 : vector<8x32xf32>
    %455 = math.exp %454 : vector<8x32xf32>
    %cst_97 = arith.constant 1.000000e+00 : f32
    %456 = vector.broadcast %cst_97 : f32 to vector<8x32xf32>
    %457 = arith.addf %456, %455 : vector<8x32xf32>
    %458 = arith.divf %456, %457 : vector<8x32xf32>
    %459 = vector.extract_strided_slice %452 {offsets = [0, 32], sizes = [8, 32], strides = [1, 1]} : vector<8x128xf32> to vector<8x32xf32>
    %460 = arith.negf %459 : vector<8x32xf32>
    %461 = math.exp %460 : vector<8x32xf32>
    %cst_98 = arith.constant 1.000000e+00 : f32
    %462 = vector.broadcast %cst_98 : f32 to vector<8x32xf32>
    %463 = arith.addf %462, %461 : vector<8x32xf32>
    %464 = arith.divf %462, %463 : vector<8x32xf32>
    %465 = vector.extract_strided_slice %452 {offsets = [0, 64], sizes = [8, 32], strides = [1, 1]} : vector<8x128xf32> to vector<8x32xf32>
    %466 = math.tanh %465 : vector<8x32xf32>
    %467 = vector.extract_strided_slice %452 {offsets = [0, 96], sizes = [8, 32], strides = [1, 1]} : vector<8x128xf32> to vector<8x32xf32>
    %468 = arith.negf %467 : vector<8x32xf32>
    %469 = math.exp %468 : vector<8x32xf32>
    %cst_99 = arith.constant 1.000000e+00 : f32
    %470 = vector.broadcast %cst_99 : f32 to vector<8x32xf32>
    %471 = arith.addf %470, %469 : vector<8x32xf32>
    %472 = arith.divf %470, %471 : vector<8x32xf32>
    %473 = arith.mulf %464, %447 : vector<8x32xf32>
    %474 = arith.mulf %458, %466 : vector<8x32xf32>
    %475 = arith.addf %473, %474 : vector<8x32xf32>
    %476 = math.tanh %475 : vector<8x32xf32>
    %477 = arith.mulf %472, %476 : vector<8x32xf32>
    %c0_100 = arith.constant 0 : index
    %c0_101 = arith.constant 0 : index
    %c0_102 = arith.constant 0 : index
    %478 = vector.load %arg12[%c0_100, %c0_101, %c0_102] : memref<2x8x32xf32, #tpu.memory_space<vmem>>, vector<1x8x32xf32>
    %479 = vector.shape_cast %478 : vector<1x8x32xf32> to vector<8x32xf32>
    %480 = vector.shape_cast %241 : vector<8x32xf32> to vector<1x8x32xf32>
    tpu.vector_store %arg12[%c0_100, %c0_101, %c0_102], %480 {strides = array<i32>} : memref<2x8x32xf32, #tpu.memory_space<vmem>>, vector<1x8x32xf32>,
    %c1_103 = arith.constant 1 : index
    %c0_104 = arith.constant 0 : index
    %c0_105 = arith.constant 0 : index
    %481 = vector.load %arg12[%c1_103, %c0_104, %c0_105] : memref<2x8x32xf32, #tpu.memory_space<vmem>>, vector<1x8x32xf32>
    %482 = vector.shape_cast %481 : vector<1x8x32xf32> to vector<8x32xf32>
    %483 = vector.shape_cast %477 : vector<8x32xf32> to vector<1x8x32xf32>
    tpu.vector_store %arg12[%c1_103, %c0_104, %c0_105], %483 {strides = array<i32>} : memref<2x8x32xf32, #tpu.memory_space<vmem>>, vector<1x8x32xf32>,
    %c0_106 = arith.constant 0 : index
    %c0_107 = arith.constant 0 : index
    %c0_108 = arith.constant 0 : index
    %484 = vector.load %arg13[%c0_106, %c0_107, %c0_108] : memref<2x8x32xf32, #tpu.memory_space<vmem>>, vector<1x8x32xf32>
    %485 = vector.shape_cast %484 : vector<1x8x32xf32> to vector<8x32xf32>
    %486 = vector.shape_cast %239 : vector<8x32xf32> to vector<1x8x32xf32>
    tpu.vector_store %arg13[%c0_106, %c0_107, %c0_108], %486 {strides = array<i32>} : memref<2x8x32xf32, #tpu.memory_space<vmem>>, vector<1x8x32xf32>,
    %c1_109 = arith.constant 1 : index
    %c0_110 = arith.constant 0 : index
    %c0_111 = arith.constant 0 : index
    %487 = vector.load %arg13[%c1_109, %c0_110, %c0_111] : memref<2x8x32xf32, #tpu.memory_space<vmem>>, vector<1x8x32xf32>
    %488 = vector.shape_cast %487 : vector<1x8x32xf32> to vector<8x32xf32>
    %489 = vector.shape_cast %475 : vector<8x32xf32> to vector<1x8x32xf32>
    tpu.vector_store %arg13[%c1_109, %c0_110, %c0_111], %489 {strides = array<i32>} : memref<2x8x32xf32, #tpu.memory_space<vmem>>, vector<1x8x32xf32>,
    %c0_112 = arith.constant 0 : index
    %c0_113 = arith.constant 0 : index
    %490 = vector.load %arg7[%c0_112, %c0_113] : memref<32x1xf32, #tpu.memory_space<vmem>>, vector<32x1xf32>
    %cst_114 = arith.constant dense<0.000000e+00> : vector<8x1xf32>
    %491 = tpu.matmul %477, %490, %cst_114 {dimension_numbers = #tpu.dot_dimension_numbers<[1], [0], [0], [1], [0, 0, 1, 1], [], []>} : vector<8x32xf32>, vector<32x1xf32>, vector<8x1xf32> -> vector<8x1xf32>
    %c0_115 = arith.constant 0 : index
    %c0_116 = arith.constant 0 : index
    %492 = vector.load %arg8[%c0_115, %c0_116] : memref<1x1xf32, #tpu.memory_space<vmem>>, vector<1x1xf32>
    %493 = vector.broadcast %492 : vector<1x1xf32> to vector<8x1xf32>
    %494 = arith.addf %491, %493 : vector<8x1xf32>
    %495 = arith.negf %494 : vector<8x1xf32>
    %496 = math.exp %495 : vector<8x1xf32>
    %cst_117 = arith.constant 1.000000e+00 : f32
    %497 = vector.broadcast %cst_117 : f32 to vector<8x1xf32>
    %498 = arith.addf %497, %496 : vector<8x1xf32>
    %499 = arith.divf %497, %498 : vector<8x1xf32>
    %c0_118 = arith.constant 0 : index
    %c0_119 = arith.constant 0 : index
    %500 = vector.load %arg11[%c0_118, %c0_119] : memref<8x1xf32, #tpu.memory_space<vmem>>, vector<8x1xf32>
    tpu.vector_store %arg11[%c0_118, %c0_119], %499 {strides = array<i32>} : memref<8x1xf32, #tpu.memory_space<vmem>>, vector<8x1xf32>,
    return
  }
}

</mosaic_0001>

<llo_original>
// kernel: sentiment_forward.1
$region0: #{sentiment_forward.1}
  #allocation0 [shape = 'u32[]', space=smem, size = 0x4, offset = 0x4, fixed_abs, tag = 'smem constant byte address 0x4 - core index']
  #allocation1 [shape = 'u32[144,128]{1,0:T(1,128)}', space=vmem, size = 0x12000, scoped, tag = 'internal scratch']
  #allocation2 [shape = 'f32[64,32]{1,0:T(8,128)}', space=vmem, size = 0x8000, scoped, tag = 'scratch operand']
  #allocation3 [shape = 'f32[1,1]{1,0:T(1,128)S(1)}', space=vmem, size = 0x200, scoped, tag = 'scoped memory for sentiment_forward.1']
  %s0 = inlined_call_operand.vmem [shape: f32[64,32], index: 0, kind: input, shape index: {}]
  %s1 = inlined_call_operand.vmem [shape: f32[32,128], index: 1, kind: input, shape index: {}]
  %s2 = inlined_call_operand.vmem [shape: f32[32,128], index: 2, kind: input, shape index: {}]
  %s3 = inlined_call_operand.vmem [shape: f32[1,128], index: 3, kind: input, shape index: {}]
  %s4 = inlined_call_operand.vmem [shape: f32[32,128], index: 4, kind: input, shape index: {}]
  %s5 = inlined_call_operand.vmem [shape: f32[32,128], index: 5, kind: input, shape index: {}]
  %s6 = inlined_call_operand.vmem [shape: f32[1,128], index: 6, kind: input, shape index: {}]
  %s7 = inlined_call_operand.vmem [shape: f32[32,1], index: 7, kind: input, shape index: {}]
  %s8 = inlined_call_operand.<no memory space> [shape: f32[1,1], index: 8, kind: input, shape index: {}]
  %s9 = inlined_call_operand.vmem [shape: f32[2,8,32], index: 9, kind: input, shape index: {}]
  %s10 = inlined_call_operand.vmem [shape: f32[2,8,32], index: 10, kind: input, shape index: {}]
  %s11 = inlined_call_operand.vmem [shape: f32[8,1], index: 11, kind: output, shape index: {0}]
  %s12 = inlined_call_operand.vmem [shape: f32[2,8,32], index: 12, kind: output, shape index: {1}]
  %s13 = inlined_call_operand.vmem [shape: f32[2,8,32], index: 13, kind: output, shape index: {2}]
  %14 = xla_tuple %s11, %s12, %s13
  %s15 = sld [smem:[#allocation0]]
  $region70: #{sentiment_forward.1} parent=0
    _
  %s17 = ssub.s32 1, %s15
  %s18 = scalar_select 0, %s17, %s15
  %v19 = vstv %s8
  %20 = vst [vmem:[#allocation3] sm:$0x1] %v19
  // Predicated region
  $region2: #{sentiment_forward.1} parent=0 // pred_check
    _
  $region3: #{sentiment_forward.1} parent=0 // pred_check_branch
    %22 = sbr.rel (0) target = $region5
  $region4: #{sentiment_forward.1} parent=0 // pred_region
    _
  $region5: #{sentiment_forward.1} parent=0 // pred_fallthru
    _
  // Predicated region
  $region6: #{sentiment_forward.1} parent=0 // pred_check
    _
  $region7: #{sentiment_forward.1} parent=0 // pred_check_branch
    %24 = sbr.rel (0) target = $region9
  $region8: #{sentiment_forward.1} parent=0 // pred_region
    _
  $region9: #{sentiment_forward.1} parent=0 // pred_fallthru
    _
  // Predicated region
  $region10: #{sentiment_forward.1} parent=0 // pred_check
    _
  $region11: #{sentiment_forward.1} parent=0 // pred_check_branch
    %26 = sbr.rel (0) target = $region13
  $region12: #{sentiment_forward.1} parent=0 // pred_region
    _
  $region13: #{sentiment_forward.1} parent=0 // pred_fallthru
    _
  // Predicated region
  $region14: #{sentiment_forward.1} parent=0 // pred_check
    _
  $region15: #{sentiment_forward.1} parent=0 // pred_check_branch
    %28 = sbr.rel (0) target = $region17
  $region16: #{sentiment_forward.1} parent=0 // pred_region
    _
  $region17: #{sentiment_forward.1} parent=0 // pred_fallthru
    _
  // Predicated region
  $region18: #{sentiment_forward.1} parent=0 // pred_check
    _
  $region19: #{sentiment_forward.1} parent=0 // pred_check_branch
    %30 = sbr.rel (0) target = $region21
  $region20: #{sentiment_forward.1} parent=0 // pred_region
    _
  $region21: #{sentiment_forward.1} parent=0 // pred_fallthru
    _
  // Predicated region
  $region22: #{sentiment_forward.1} parent=0 // pred_check
    _
  $region23: #{sentiment_forward.1} parent=0 // pred_check_branch
    %32 = sbr.rel (0) target = $region25
  $region24: #{sentiment_forward.1} parent=0 // pred_region
    _
  $region25: #{sentiment_forward.1} parent=0 // pred_fallthru
    _
  // Predicated region
  $region26: #{sentiment_forward.1} parent=0 // pred_check
    _
  $region27: #{sentiment_forward.1} parent=0 // pred_check_branch
    %34 = sbr.rel (0) target = $region29
  $region28: #{sentiment_forward.1} parent=0 // pred_region
    _
  $region29: #{sentiment_forward.1} parent=0 // pred_fallthru
    _
  // Predicated region
  $region30: #{sentiment_forward.1} parent=0 // pred_check
    _
  $region31: #{sentiment_forward.1} parent=0 // pred_check_branch
    %36 = sbr.rel (0) target = $region33
  $region32: #{sentiment_forward.1} parent=0 // pred_region
    _
  $region33: #{sentiment_forward.1} parent=0 // pred_fallthru
    _
  // Predicated region
  $region34: #{sentiment_forward.1} parent=0 // pred_check
    _
  $region35: #{sentiment_forward.1} parent=0 // pred_check_branch
    %38 = sbr.rel (0) target = $region37
  $region36: #{sentiment_forward.1} parent=0 // pred_region
    _
  $region37: #{sentiment_forward.1} parent=0 // pred_fallthru
    _
  // Predicated region
  $region38: #{sentiment_forward.1} parent=0 // pred_check
    _
  $region39: #{sentiment_forward.1} parent=0 // pred_check_branch
    %40 = sbr.rel (0) target = $region41
  $region40: #{sentiment_forward.1} parent=0 // pred_region
    _
  $region41: #{sentiment_forward.1} parent=0 // pred_fallthru
    _
  // Predicated region
  $region42: #{sentiment_forward.1} parent=0 // pred_check
    _
  $region43: #{sentiment_forward.1} parent=0 // pred_check_branch
    %42 = sbr.rel (0) target = $region45
  $region44: #{sentiment_forward.1} parent=0 // pred_region
    _
  $region45: #{sentiment_forward.1} parent=0 // pred_fallthru
    _
  %v43 = vld [vmem:[%s0] sm:$0xff]
  %v44 = vld [vmem:[%s0 + $0x8] sm:$0xff]
  %v45 = vld [vmem:[%s0 + $0x10] sm:$0xff]
  %v46 = vld [vmem:[%s0 + $0x18] sm:$0xff]
  %v47 = vld [vmem:[%s0 + $0x20] sm:$0xff]
  %v48 = vld [vmem:[%s0 + $0x28] sm:$0xff]
  %v49 = vld [vmem:[%s0 + $0x30] sm:$0xff]
  %v50 = vld [vmem:[%s0 + $0x38] sm:$0xff]
  %v51 = vld [vmem:[%s1] sm:$0xff]
  %v52 = vld [vmem:[%s1 + $0x8] sm:$0xff]
  %v53 = vld [vmem:[%s1 + $0x10] sm:$0xff]
  %v54 = vld [vmem:[%s1 + $0x18] sm:$0xff]
  %v55 = vld [vmem:[%s3] sm:$0x1]
  %v57 = vlaneseq
  %v58 = vshrl.u32 %v57, 7
  %v59 = vsub.s32 0, %v58
  %v60 = vrot.slane %v55, %v59
  %vm62 = vcmask 261120
  %v64 = vsel %vm62, %v43, 0
  %v67 = vsel %vm62, %v44, 0
  %v70 = vsel %vm62, %v45, 0
  %v73 = vsel %vm62, %v46, 0
  %v76 = vsel %vm62, %v47, 0
  %v79 = vsel %vm62, %v48, 0
  %v82 = vsel %vm62, %v49, 0
  %v85 = vsel %vm62, %v50, 0
  %87 = vmatprep.subr.mxu0 0.0
  %88 = vmatpush1.msra.mxu0 0.0
  %89 = vmatprep.subr.mxu0 0.0
  %90 = vmatpush1.msra.mxu0 0.0
  %91 = vmatprep.subr.mxu0 0.0
  %92 = vmatpush1.msra.mxu0 0.0
  %93 = vmatprep.subr.mxu0 0.0
  %94 = vmatpush1.msra.mxu0 0.0
  %95 = vmatprep.subr.mxu0 0.0
  %96 = vmatpush1.msra.mxu0 0.0
  %97 = vmatprep.subr.mxu0 0.0
  %98 = vmatpush1.msra.mxu0 0.0
  %99 = vmatprep.subr.mxu0 0.0
  %100 = vmatpush1.msra.mxu0 0.0
  %101 = vmatprep.subr.mxu0 0.0
  %102 = vmatpush1.msra.mxu0 0.0
  %103 = vmatprep.subr.mxu0 0.0
  %104 = vmatpush1.msra.mxu0 0.0
  %105 = vmatprep.subr.mxu0 0.0
  %106 = vmatpush1.msra.mxu0 0.0
  %107 = vmatprep.subr.mxu0 0.0
  %108 = vmatpush1.msra.mxu0 0.0
  %109 = vmatprep.subr.mxu0 0.0
  %110 = vmatpush1.msra.mxu0 0.0
  %111 = vmatprep.subr.mxu0 0.0
  %112 = vmatpush1.msra.mxu0 %v54
  %113 = vmatprep.subr.mxu0 0.0
  %114 = vmatpush1.msra.mxu0 %v53
  %115 = vmatprep.subr.mxu0 0.0
  %116 = vmatpush1.msra.mxu0 %v52
  %117 = vmatprep.subr.mxu0 0.0
  %118 = vmatpush1.msra.mxu0 %v51
  %119 = vmatprep.subr.mxu0 0.0
  %120 = vmatpush2.msra.mxu0 0.0
  %121 = vmatprep.subr.mxu0 0.0
  %122 = vmatpush2.msra.mxu0 0.0
  %123 = vmatprep.subr.mxu0 0.0
  %124 = vmatpush2.msra.mxu0 0.0
  %125 = vmatprep.subr.mxu0 0.0
  %126 = vmatpush2.msra.mxu0 0.0
  %127 = vmatprep.subr.mxu0 0.0
  %128 = vmatpush2.msra.mxu0 0.0
  %129 = vmatprep.subr.mxu0 0.0
  %130 = vmatpush2.msra.mxu0 0.0
  %131 = vmatprep.subr.mxu0 0.0
  %132 = vmatpush2.msra.mxu0 0.0
  %133 = vmatprep.subr.mxu0 0.0
  %134 = vmatpush2.msra.mxu0 0.0
  %135 = vmatprep.subr.mxu0 0.0
  %136 = vmatpush2.msra.mxu0 0.0
  %137 = vmatprep.subr.mxu0 0.0
  %138 = vmatpush2.msra.mxu0 0.0
  %139 = vmatprep.subr.mxu0 0.0
  %140 = vmatpush2.msra.mxu0 0.0
  %141 = vmatprep.subr.mxu0 0.0
  %142 = vmatpush2.msra.mxu0 0.0
  %143 = vmatprep.subr.mxu0 0.0
  %144 = vmatpush2.msra.mxu0 0.0
  %145 = vmatprep.subr.mxu0 0.0
  %146 = vmatpush2.msra.mxu0 0.0
  %147 = vmatprep.subr.mxu0 0.0
  %148 = vmatpush2.msra.mxu0 0.0
  %149 = vmatprep.subr.mxu0 0.0
  %150 = vmatpush2.msra.mxu0 0.0
  %151 = vmatprep.mubr.f32.mxu0 0.0
  %152 = vmatmul.mubr.f32.gmra.mxu0 %v64
  %v153 = vpop.f32.mrf.mxu0
  %v154 = vadd.f32 %v60, %v153
  %v155 = vpop.f32.mrf.mxu0
  %156 = vmatprep.mubr.f32.mxu0 0.0
  %157 = vmatmul.mubr.f32.gmra.mxu0 %v67
  %v158 = vpop.f32.mrf.mxu0
  %v159 = vadd.f32 %v60, %v158
  %v160 = vpop.f32.mrf.mxu0
  %161 = vmatprep.mubr.f32.mxu0 0.0
  %162 = vmatmul.mubr.f32.gmra.mxu0 %v70
  %v163 = vpop.f32.mrf.mxu0
  %v164 = vadd.f32 %v60, %v163
  %v165 = vpop.f32.mrf.mxu0
  %166 = vmatprep.mubr.f32.mxu0 0.0
  %167 = vmatmul.mubr.f32.gmra.mxu0 %v73
  %v168 = vpop.f32.mrf.mxu0
  %v169 = vadd.f32 %v60, %v168
  %v170 = vpop.f32.mrf.mxu0
  %171 = vmatprep.mubr.f32.mxu0 0.0
  %172 = vmatmul.mubr.f32.gmra.mxu0 %v76
  %v173 = vpop.f32.mrf.mxu0
  %v174 = vadd.f32 %v60, %v173
  %v175 = vpop.f32.mrf.mxu0
  %176 = vmatprep.mubr.f32.mxu0 0.0
  %177 = vmatmul.mubr.f32.gmra.mxu0 %v79
  %v178 = vpop.f32.mrf.mxu0
  %v179 = vadd.f32 %v60, %v178
  %v180 = vpop.f32.mrf.mxu0
  %181 = vmatprep.mubr.f32.mxu0 0.0
  %182 = vmatmul.mubr.f32.gmra.mxu0 %v82
  %v183 = vpop.f32.mrf.mxu0
  %v184 = vadd.f32 %v60, %v183
  %v185 = vpop.f32.mrf.mxu0
  %186 = vmatprep.mubr.f32.mxu0 0.0
  %187 = vmatmul.mubr.f32.gmra.mxu0 %v85
  %v188 = vpop.f32.mrf.mxu0
  %v189 = vadd.f32 %v60, %v188
  %v190 = vpop.f32.mrf.mxu0
  %191 = vdwg.mxu0
  %v192 = vld [vmem:[%s9] sm:$0xff]
  %v193 = vld [vmem:[%s10] sm:$0xff]
  %v194 = vld [vmem:[%s2] sm:$0xff]
  %v195 = vld [vmem:[%s2 + $0x8] sm:$0xff]
  %v196 = vld [vmem:[%s2 + $0x10] sm:$0xff]
  %v197 = vld [vmem:[%s2 + $0x18] sm:$0xff]
  %v199 = vsel %vm62, %v192, 0
  %201 = vmatprep.subr.mxu0 0.0
  %202 = vmatpush1.msra.mxu0 0.0
  %203 = vmatprep.subr.mxu0 0.0
  %204 = vmatpush1.msra.mxu0 0.0
  %205 = vmatprep.subr.mxu0 0.0
  %206 = vmatpush1.msra.mxu0 0.0
  %207 = vmatprep.subr.mxu0 0.0
  %208 = vmatpush1.msra.mxu0 0.0
  %209 = vmatprep.subr.mxu0 0.0
  %210 = vmatpush1.msra.mxu0 0.0
  %211 = vmatprep.subr.mxu0 0.0
  %212 = vmatpush1.msra.mxu0 0.0
  %213 = vmatprep.subr.mxu0 0.0
  %214 = vmatpush1.msra.mxu0 0.0
  %215 = vmatprep.subr.mxu0 0.0
  %216 = vmatpush1.msra.mxu0 0.0
  %217 = vmatprep.subr.mxu0 0.0
  %218 = vmatpush1.msra.mxu0 0.0
  %219 = vmatprep.subr.mxu0 0.0
  %220 = vmatpush1.msra.mxu0 0.0
  %221 = vmatprep.subr.mxu0 0.0
  %222 = vmatpush1.msra.mxu0 0.0
  %223 = vmatprep.subr.mxu0 0.0
  %224 = vmatpush1.msra.mxu0 0.0
  %225 = vmatprep.subr.mxu0 0.0
  %226 = vmatpush1.msra.mxu0 %v197
  %227 = vmatprep.subr.mxu0 0.0
  %228 = vmatpush1.msra.mxu0 %v196
  %229 = vmatprep.subr.mxu0 0.0
  %230 = vmatpush1.msra.mxu0 %v195
  %231 = vmatprep.subr.mxu0 0.0
  %232 = vmatpush1.msra.mxu0 %v194
  %233 = vmatprep.subr.mxu0 0.0
  %234 = vmatpush2.msra.mxu0 0.0
  %235 = vmatprep.subr.mxu0 0.0
  %236 = vmatpush2.msra.mxu0 0.0
  %237 = vmatprep.subr.mxu0 0.0
  %238 = vmatpush2.msra.mxu0 0.0
  %239 = vmatprep.subr.mxu0 0.0
  %240 = vmatpush2.msra.mxu0 0.0
  %241 = vmatprep.subr.mxu0 0.0
  %242 = vmatpush2.msra.mxu0 0.0
  %243 = vmatprep.subr.mxu0 0.0
  %244 = vmatpush2.msra.mxu0 0.0
  %245 = vmatprep.subr.mxu0 0.0
  %246 = vmatpush2.msra.mxu0 0.0
  %247 = vmatprep.subr.mxu0 0.0
  %248 = vmatpush2.msra.mxu0 0.0
  %249 = vmatprep.subr.mxu0 0.0
  %250 = vmatpush2.msra.mxu0 0.0
  %251 = vmatprep.subr.mxu0 0.0
  %252 = vmatpush2.msra.mxu0 0.0
  %253 = vmatprep.subr.mxu0 0.0
  %254 = vmatpush2.msra.mxu0 0.0
  %255 = vmatprep.subr.mxu0 0.0
  %256 = vmatpush2.msra.mxu0 0.0
  %257 = vmatprep.subr.mxu0 0.0
  %258 = vmatpush2.msra.mxu0 0.0
  %259 = vmatprep.subr.mxu0 0.0
  %260 = vmatpush2.msra.mxu0 0.0
  %261 = vmatprep.subr.mxu0 0.0
  %262 = vmatpush2.msra.mxu0 0.0
  %263 = vmatprep.subr.mxu0 0.0
  %264 = vmatpush2.msra.mxu0 0.0
  %265 = vmatprep.mubr.f32.mxu0 0.0
  %266 = vmatmul.mubr.f32.gmra.mxu0 %v199
  %v267 = vpop.f32.mrf.mxu0
  %v268 = vadd.f32 0.0, %v267
  %v269 = vpop.f32.mrf.mxu0
  %270 = vdwg.mxu0
  %v271 = vadd.f32 %v154, %v268
  %v272 = vxor.u32 %v271, 2147483648
  %v273 = vmul.f32 %v272, 1.442695
  %v274 = vpow.pop %v273
  %v275 = vadd.f32 %v274, 1.0
  %v276 = vrcp.pop %v275
  %v277 = vmul.f32 1.0, %v276
  %v278 = vtanh.pop %v271
  %280 = vrot.lane.b32.xlu0 %v193, 32
  %v281 = vpop.permute.xlu0 %280
  %v283 = vmul.f32 %v277, %v281
  %285 = vrot.lane.b32.xlu0 %v278, 64
  %v286 = vpop.permute.xlu0 %285
  %v288 = vmul.f32 %v277, %v286
  %290 = vrot.lane.b32.xlu0 %v288, 32
  %v291 = vpop.permute.xlu0 %290
  %v293 = vadd.f32 %v283, %v291
  %v294 = vtanh.pop %v293
  %296 = vrot.lane.b32.xlu0 %v294, 64
  %v297 = vpop.permute.xlu0 %296
  %v299 = vmul.f32 %v277, %v297
  %301 = vrot.lane.b32.xlu0 %v299, 32
  %v302 = vpop.permute.xlu0 %301
  %304 = vst.msk [vmem:[#allocation2] sm:$0xff] %vm62, %v302
  %v305 = vsel %vm62, %v302, 0
  %307 = vmatprep.subr.mxu0 0.0
  %308 = vmatpush1.msra.mxu0 0.0
  %309 = vmatprep.subr.mxu0 0.0
  %310 = vmatpush1.msra.mxu0 0.0
  %311 = vmatprep.subr.mxu0 0.0
  %312 = vmatpush1.msra.mxu0 0.0
  %313 = vmatprep.subr.mxu0 0.0
  %314 = vmatpush1.msra.mxu0 0.0
  %315 = vmatprep.subr.mxu0 0.0
  %316 = vmatpush1.msra.mxu0 0.0
  %317 = vmatprep.subr.mxu0 0.0
  %318 = vmatpush1.msra.mxu0 0.0
  %319 = vmatprep.subr.mxu0 0.0
  %320 = vmatpush1.msra.mxu0 0.0
  %321 = vmatprep.subr.mxu0 0.0
  %322 = vmatpush1.msra.mxu0 0.0
  %323 = vmatprep.subr.mxu0 0.0
  %324 = vmatpush1.msra.mxu0 0.0
  %325 = vmatprep.subr.mxu0 0.0
  %326 = vmatpush1.msra.mxu0 0.0
  %327 = vmatprep.subr.mxu0 0.0
  %328 = vmatpush1.msra.mxu0 0.0
  %329 = vmatprep.subr.mxu0 0.0
  %330 = vmatpush1.msra.mxu0 0.0
  %331 = vmatprep.subr.mxu0 0.0
  %332 = vmatpush1.msra.mxu0 %v197
  %333 = vmatprep.subr.mxu0 0.0
  %334 = vmatpush1.msra.mxu0 %v196
  %335 = vmatprep.subr.mxu0 0.0
  %336 = vmatpush1.msra.mxu0 %v195
  %337 = vmatprep.subr.mxu0 0.0
  %338 = vmatpush1.msra.mxu0 %v194
  %339 = vmatprep.subr.mxu0 0.0
  %340 = vmatpush2.msra.mxu0 0.0
  %341 = vmatprep.subr.mxu0 0.0
  %342 = vmatpush2.msra.mxu0 0.0
  %343 = vmatprep.subr.mxu0 0.0
  %344 = vmatpush2.msra.mxu0 0.0
  %345 = vmatprep.subr.mxu0 0.0
  %346 = vmatpush2.msra.mxu0 0.0
  %347 = vmatprep.subr.mxu0 0.0
  %348 = vmatpush2.msra.mxu0 0.0
  %349 = vmatprep.subr.mxu0 0.0
  %350 = vmatpush2.msra.mxu0 0.0
  %351 = vmatprep.subr.mxu0 0.0
  %352 = vmatpush2.msra.mxu0 0.0
  %353 = vmatprep.subr.mxu0 0.0
  %354 = vmatpush2.msra.mxu0 0.0
  %355 = vmatprep.subr.mxu0 0.0
  %356 = vmatpush2.msra.mxu0 0.0
  %357 = vmatprep.subr.mxu0 0.0
  %358 = vmatpush2.msra.mxu0 0.0
  %359 = vmatprep.subr.mxu0 0.0
  %360 = vmatpush2.msra.mxu0 0.0
  %361 = vmatprep.subr.mxu0 0.0
  %362 = vmatpush2.msra.mxu0 0.0
  %363 = vmatprep.subr.mxu0 0.0
  %364 = vmatpush2.msra.mxu0 0.0
  %365 = vmatprep.subr.mxu0 0.0
  %366 = vmatpush2.msra.mxu0 0.0
  %367 = vmatprep.subr.mxu0 0.0
  %368 = vmatpush2.msra.mxu0 0.0
  %369 = vmatprep.subr.mxu0 0.0
  %370 = vmatpush2.msra.mxu0 0.0
  %371 = vmatprep.mubr.f32.mxu0 0.0
  %372 = vmatmul.mubr.f32.gmra.mxu0 %v305
  %v373 = vpop.f32.mrf.mxu0
  %v374 = vadd.f32 0.0, %v373
  %v375 = vpop.f32.mrf.mxu0
  %376 = vdwg.mxu0
  %v377 = vadd.f32 %v159, %v374
  %v378 = vxor.u32 %v377, 2147483648
  %v379 = vmul.f32 %v378, 1.442695
  %v380 = vpow.pop %v379
  %v381 = vadd.f32 %v380, 1.0
  %v382 = vrcp.pop %v381
  %v383 = vmul.f32 1.0, %v382
  %v384 = vtanh.pop %v377
  %v385 = vmul.f32 %v383, %v293
  %387 = vrot.lane.b32.xlu0 %v384, 64
  %v388 = vpop.permute.xlu0 %387
  %v390 = vmul.f32 %v383, %v388
  %392 = vrot.lane.b32.xlu0 %v390, 32
  %v393 = vpop.permute.xlu0 %392
  %v395 = vadd.f32 %v385, %v393
  %v396 = vtanh.pop %v395
  %398 = vrot.lane.b32.xlu0 %v396, 64
  %v399 = vpop.permute.xlu0 %398
  %v401 = vmul.f32 %v383, %v399
  %403 = vrot.lane.b32.xlu0 %v401, 32
  %v404 = vpop.permute.xlu0 %403
  %406 = vst.msk [vmem:[#allocation2 + $0x8] sm:$0xff] %vm62, %v404
  %v407 = vsel %vm62, %v404, 0
  %409 = vmatprep.subr.mxu0 0.0
  %410 = vmatpush1.msra.mxu0 0.0
  %411 = vmatprep.subr.mxu0 0.0
  %412 = vmatpush1.msra.mxu0 0.0
  %413 = vmatprep.subr.mxu0 0.0
  %414 = vmatpush1.msra.mxu0 0.0
  %415 = vmatprep.subr.mxu0 0.0
  %416 = vmatpush1.msra.mxu0 0.0
  %417 = vmatprep.subr.mxu0 0.0
  %418 = vmatpush1.msra.mxu0 0.0
  %419 = vmatprep.subr.mxu0 0.0
  %420 = vmatpush1.msra.mxu0 0.0
  %421 = vmatprep.subr.mxu0 0.0
  %422 = vmatpush1.msra.mxu0 0.0
  %423 = vmatprep.subr.mxu0 0.0
  %424 = vmatpush1.msra.mxu0 0.0
  %425 = vmatprep.subr.mxu0 0.0
  %426 = vmatpush1.msra.mxu0 0.0
  %427 = vmatprep.subr.mxu0 0.0
  %428 = vmatpush1.msra.mxu0 0.0
  %429 = vmatprep.subr.mxu0 0.0
  %430 = vmatpush1.msra.mxu0 0.0
  %431 = vmatprep.subr.mxu0 0.0
  %432 = vmatpush1.msra.mxu0 0.0
  %433 = vmatprep.subr.mxu0 0.0
  %434 = vmatpush1.msra.mxu0 %v197
  %435 = vmatprep.subr.mxu0 0.0
  %436 = vmatpush1.msra.mxu0 %v196
  %437 = vmatprep.subr.mxu0 0.0
  %438 = vmatpush1.msra.mxu0 %v195
  %439 = vmatprep.subr.mxu0 0.0
  %440 = vmatpush1.msra.mxu0 %v194
  %441 = vmatprep.subr.mxu0 0.0
  %442 = vmatpush2.msra.mxu0 0.0
  %443 = vmatprep.subr.mxu0 0.0
  %444 = vmatpush2.msra.mxu0 0.0
  %445 = vmatprep.subr.mxu0 0.0
  %446 = vmatpush2.msra.mxu0 0.0
  %447 = vmatprep.subr.mxu0 0.0
  %448 = vmatpush2.msra.mxu0 0.0
  %449 = vmatprep.subr.mxu0 0.0
  %450 = vmatpush2.msra.mxu0 0.0
  %451 = vmatprep.subr.mxu0 0.0
  %452 = vmatpush2.msra.mxu0 0.0
  %453 = vmatprep.subr.mxu0 0.0
  %454 = vmatpush2.msra.mxu0 0.0
  %455 = vmatprep.subr.mxu0 0.0
  %456 = vmatpush2.msra.mxu0 0.0
  %457 = vmatprep.subr.mxu0 0.0
  %458 = vmatpush2.msra.mxu0 0.0
  %459 = vmatprep.subr.mxu0 0.0
  %460 = vmatpush2.msra.mxu0 0.0
  %461 = vmatprep.subr.mxu0 0.0
  %462 = vmatpush2.msra.mxu0 0.0
  %463 = vmatprep.subr.mxu0 0.0
  %464 = vmatpush2.msra.mxu0 0.0
  %465 = vmatprep.subr.mxu0 0.0
  %466 = vmatpush2.msra.mxu0 0.0
  %467 = vmatprep.subr.mxu0 0.0
  %468 = vmatpush2.msra.mxu0 0.0
  %469 = vmatprep.subr.mxu0 0.0
  %470 = vmatpush2.msra.mxu0 0.0
  %471 = vmatprep.subr.mxu0 0.0
  %472 = vmatpush2.msra.mxu0 0.0
  %473 = vmatprep.mubr.f32.mxu0 0.0
  %474 = vmatmul.mubr.f32.gmra.mxu0 %v407
  %v475 = vpop.f32.mrf.mxu0
  %v476 = vadd.f32 0.0, %v475
  %v477 = vpop.f32.mrf.mxu0
  %478 = vdwg.mxu0
  %v479 = vadd.f32 %v164, %v476
  %v480 = vxor.u32 %v479, 2147483648
  %v481 = vmul.f32 %v480, 1.442695
  %v482 = vpow.pop %v481
  %v483 = vadd.f32 %v482, 1.0
  %v484 = vrcp.pop %v483
  %v485 = vmul.f32 1.0, %v484
  %v486 = vtanh.pop %v479
  %v487 = vmul.f32 %v485, %v395
  %489 = vrot.lane.b32.xlu0 %v486, 64
  %v490 = vpop.permute.xlu0 %489
  %v492 = vmul.f32 %v485, %v490
  %494 = vrot.lane.b32.xlu0 %v492, 32
  %v495 = vpop.permute.xlu0 %494
  %v497 = vadd.f32 %v487, %v495
  %v498 = vtanh.pop %v497
  %500 = vrot.lane.b32.xlu0 %v498, 64
  %v501 = vpop.permute.xlu0 %500
  %v503 = vmul.f32 %v485, %v501
  %505 = vrot.lane.b32.xlu0 %v503, 32
  %v506 = vpop.permute.xlu0 %505
  %508 = vst.msk [vmem:[#allocation2 + $0x10] sm:$0xff] %vm62, %v506
  %v509 = vsel %vm62, %v506, 0
  %511 = vmatprep.subr.mxu0 0.0
  %512 = vmatpush1.msra.mxu0 0.0
  %513 = vmatprep.subr.mxu0 0.0
  %514 = vmatpush1.msra.mxu0 0.0
  %515 = vmatprep.subr.mxu0 0.0
  %516 = vmatpush1.msra.mxu0 0.0
  %517 = vmatprep.subr.mxu0 0.0
  %518 = vmatpush1.msra.mxu0 0.0
  %519 = vmatprep.subr.mxu0 0.0
  %520 = vmatpush1.msra.mxu0 0.0
  %521 = vmatprep.subr.mxu0 0.0
  %522 = vmatpush1.msra.mxu0 0.0
  %523 = vmatprep.subr.mxu0 0.0
  %524 = vmatpush1.msra.mxu0 0.0
  %525 = vmatprep.subr.mxu0 0.0
  %526 = vmatpush1.msra.mxu0 0.0
  %527 = vmatprep.subr.mxu0 0.0
  %528 = vmatpush1.msra.mxu0 0.0
  %529 = vmatprep.subr.mxu0 0.0
  %530 = vmatpush1.msra.mxu0 0.0
  %531 = vmatprep.subr.mxu0 0.0
  %532 = vmatpush1.msra.mxu0 0.0
  %533 = vmatprep.subr.mxu0 0.0
  %534 = vmatpush1.msra.mxu0 0.0
  %535 = vmatprep.subr.mxu0 0.0
  %536 = vmatpush1.msra.mxu0 %v197
  %537 = vmatprep.subr.mxu0 0.0
  %538 = vmatpush1.msra.mxu0 %v196
  %539 = vmatprep.subr.mxu0 0.0
  %540 = vmatpush1.msra.mxu0 %v195
  %541 = vmatprep.subr.mxu0 0.0
  %542 = vmatpush1.msra.mxu0 %v194
  %543 = vmatprep.subr.mxu0 0.0
  %544 = vmatpush2.msra.mxu0 0.0
  %545 = vmatprep.subr.mxu0 0.0
  %546 = vmatpush2.msra.mxu0 0.0
  %547 = vmatprep.subr.mxu0 0.0
  %548 = vmatpush2.msra.mxu0 0.0
  %549 = vmatprep.subr.mxu0 0.0
  %550 = vmatpush2.msra.mxu0 0.0
  %551 = vmatprep.subr.mxu0 0.0
  %552 = vmatpush2.msra.mxu0 0.0
  %553 = vmatprep.subr.mxu0 0.0
  %554 = vmatpush2.msra.mxu0 0.0
  %555 = vmatprep.subr.mxu0 0.0
  %556 = vmatpush2.msra.mxu0 0.0
  %557 = vmatprep.subr.mxu0 0.0
  %558 = vmatpush2.msra.mxu0 0.0
  %559 = vmatprep.subr.mxu0 0.0
  %560 = vmatpush2.msra.mxu0 0.0
  %561 = vmatprep.subr.mxu0 0.0
  %562 = vmatpush2.msra.mxu0 0.0
  %563 = vmatprep.subr.mxu0 0.0
  %564 = vmatpush2.msra.mxu0 0.0
  %565 = vmatprep.subr.mxu0 0.0
  %566 = vmatpush2.msra.mxu0 0.0
  %567 = vmatprep.subr.mxu0 0.0
  %568 = vmatpush2.msra.mxu0 0.0
  %569 = vmatprep.subr.mxu0 0.0
  %570 = vmatpush2.msra.mxu0 0.0
  %571 = vmatprep.subr.mxu0 0.0
  %572 = vmatpush2.msra.mxu0 0.0
  %573 = vmatprep.subr.mxu0 0.0
  %574 = vmatpush2.msra.mxu0 0.0
  %575 = vmatprep.mubr.f32.mxu0 0.0
  %576 = vmatmul.mubr.f32.gmra.mxu0 %v509
  %v577 = vpop.f32.mrf.mxu0
  %v578 = vadd.f32 0.0, %v577
  %v579 = vpop.f32.mrf.mxu0
  %580 = vdwg.mxu0
  %v581 = vadd.f32 %v169, %v578
  %v582 = vxor.u32 %v581, 2147483648
  %v583 = vmul.f32 %v582, 1.442695
  %v584 = vpow.pop %v583
  %v585 = vadd.f32 %v584, 1.0
  %v586 = vrcp.pop %v585
  %v587 = vmul.f32 1.0, %v586
  %v588 = vtanh.pop %v581
  %v589 = vmul.f32 %v587, %v497
  %591 = vrot.lane.b32.xlu0 %v588, 64
  %v592 = vpop.permute.xlu0 %591
  %v594 = vmul.f32 %v587, %v592
  %596 = vrot.lane.b32.xlu0 %v594, 32
  %v597 = vpop.permute.xlu0 %596
  %v599 = vadd.f32 %v589, %v597
  %v600 = vtanh.pop %v599
  %602 = vrot.lane.b32.xlu0 %v600, 64
  %v603 = vpop.permute.xlu0 %602
  %v605 = vmul.f32 %v587, %v603
  %607 = vrot.lane.b32.xlu0 %v605, 32
  %v608 = vpop.permute.xlu0 %607
  %610 = vst.msk [vmem:[#allocation2 + $0x18] sm:$0xff] %vm62, %v608
  %v611 = vsel %vm62, %v608, 0
  %613 = vmatprep.subr.mxu0 0.0
  %614 = vmatpush1.msra.mxu0 0.0
  %615 = vmatprep.subr.mxu0 0.0
  %616 = vmatpush1.msra.mxu0 0.0
  %617 = vmatprep.subr.mxu0 0.0
  %618 = vmatpush1.msra.mxu0 0.0
  %619 = vmatprep.subr.mxu0 0.0
  %620 = vmatpush1.msra.mxu0 0.0
  %621 = vmatprep.subr.mxu0 0.0
  %622 = vmatpush1.msra.mxu0 0.0
  %623 = vmatprep.subr.mxu0 0.0
  %624 = vmatpush1.msra.mxu0 0.0
  %625 = vmatprep.subr.mxu0 0.0
  %626 = vmatpush1.msra.mxu0 0.0
  %627 = vmatprep.subr.mxu0 0.0
  %628 = vmatpush1.msra.mxu0 0.0
  %629 = vmatprep.subr.mxu0 0.0
  %630 = vmatpush1.msra.mxu0 0.0
  %631 = vmatprep.subr.mxu0 0.0
  %632 = vmatpush1.msra.mxu0 0.0
  %633 = vmatprep.subr.mxu0 0.0
  %634 = vmatpush1.msra.mxu0 0.0
  %635 = vmatprep.subr.mxu0 0.0
  %636 = vmatpush1.msra.mxu0 0.0
  %637 = vmatprep.subr.mxu0 0.0
  %638 = vmatpush1.msra.mxu0 %v197
  %639 = vmatprep.subr.mxu0 0.0
  %640 = vmatpush1.msra.mxu0 %v196
  %641 = vmatprep.subr.mxu0 0.0
  %642 = vmatpush1.msra.mxu0 %v195
  %643 = vmatprep.subr.mxu0 0.0
  %644 = vmatpush1.msra.mxu0 %v194
  %645 = vmatprep.subr.mxu0 0.0
  %646 = vmatpush2.msra.mxu0 0.0
  %647 = vmatprep.subr.mxu0 0.0
  %648 = vmatpush2.msra.mxu0 0.0
  %649 = vmatprep.subr.mxu0 0.0
  %650 = vmatpush2.msra.mxu0 0.0
  %651 = vmatprep.subr.mxu0 0.0
  %652 = vmatpush2.msra.mxu0 0.0
  %653 = vmatprep.subr.mxu0 0.0
  %654 = vmatpush2.msra.mxu0 0.0
  %655 = vmatprep.subr.mxu0 0.0
  %656 = vmatpush2.msra.mxu0 0.0
  %657 = vmatprep.subr.mxu0 0.0
  %658 = vmatpush2.msra.mxu0 0.0
  %659 = vmatprep.subr.mxu0 0.0
  %660 = vmatpush2.msra.mxu0 0.0
  %661 = vmatprep.subr.mxu0 0.0
  %662 = vmatpush2.msra.mxu0 0.0
  %663 = vmatprep.subr.mxu0 0.0
  %664 = vmatpush2.msra.mxu0 0.0
  %665 = vmatprep.subr.mxu0 0.0
  %666 = vmatpush2.msra.mxu0 0.0
  %667 = vmatprep.subr.mxu0 0.0
  %668 = vmatpush2.msra.mxu0 0.0
  %669 = vmatprep.subr.mxu0 0.0
  %670 = vmatpush2.msra.mxu0 0.0
  %671 = vmatprep.subr.mxu0 0.0
  %672 = vmatpush2.msra.mxu0 0.0
  %673 = vmatprep.subr.mxu0 0.0
  %674 = vmatpush2.msra.mxu0 0.0
  %675 = vmatprep.subr.mxu0 0.0
  %676 = vmatpush2.msra.mxu0 0.0
  %677 = vmatprep.mubr.f32.mxu0 0.0
  %678 = vmatmul.mubr.f32.gmra.mxu0 %v611
  %v679 = vpop.f32.mrf.mxu0
  %v680 = vadd.f32 0.0, %v679
  %v681 = vpop.f32.mrf.mxu0
  %682 = vdwg.mxu0
  %v683 = vadd.f32 %v174, %v680
  %v684 = vxor.u32 %v683, 2147483648
  %v685 = vmul.f32 %v684, 1.442695
  %v686 = vpow.pop %v685
  %v687 = vadd.f32 %v686, 1.0
  %v688 = vrcp.pop %v687
  %v689 = vmul.f32 1.0, %v688
  %v690 = vtanh.pop %v683
  %v691 = vmul.f32 %v689, %v599
  %693 = vrot.lane.b32.xlu0 %v690, 64
  %v694 = vpop.permute.xlu0 %693
  %v696 = vmul.f32 %v689, %v694
  %698 = vrot.lane.b32.xlu0 %v696, 32
  %v699 = vpop.permute.xlu0 %698
  %v701 = vadd.f32 %v691, %v699
  %v702 = vtanh.pop %v701
  %704 = vrot.lane.b32.xlu0 %v702, 64
  %v705 = vpop.permute.xlu0 %704
  %v707 = vmul.f32 %v689, %v705
  %709 = vrot.lane.b32.xlu0 %v707, 32
  %v710 = vpop.permute.xlu0 %709
  %712 = vst.msk [vmem:[#allocation2 + $0x20] sm:$0xff] %vm62, %v710
  %v713 = vsel %vm62, %v710, 0
  %715 = vmatprep.subr.mxu0 0.0
  %716 = vmatpush1.msra.mxu0 0.0
  %717 = vmatprep.subr.mxu0 0.0
  %718 = vmatpush1.msra.mxu0 0.0
  %719 = vmatprep.subr.mxu0 0.0
  %720 = vmatpush1.msra.mxu0 0.0
  %721 = vmatprep.subr.mxu0 0.0
  %722 = vmatpush1.msra.mxu0 0.0
  %723 = vmatprep.subr.mxu0 0.0
  %724 = vmatpush1.msra.mxu0 0.0
  %725 = vmatprep.subr.mxu0 0.0
  %726 = vmatpush1.msra.mxu0 0.0
  %727 = vmatprep.subr.mxu0 0.0
  %728 = vmatpush1.msra.mxu0 0.0
  %729 = vmatprep.subr.mxu0 0.0
  %730 = vmatpush1.msra.mxu0 0.0
  %731 = vmatprep.subr.mxu0 0.0
  %732 = vmatpush1.msra.mxu0 0.0
  %733 = vmatprep.subr.mxu0 0.0
  %734 = vmatpush1.msra.mxu0 0.0
  %735 = vmatprep.subr.mxu0 0.0
  %736 = vmatpush1.msra.mxu0 0.0
  %737 = vmatprep.subr.mxu0 0.0
  %738 = vmatpush1.msra.mxu0 0.0
  %739 = vmatprep.subr.mxu0 0.0
  %740 = vmatpush1.msra.mxu0 %v197
  %741 = vmatprep.subr.mxu0 0.0
  %742 = vmatpush1.msra.mxu0 %v196
  %743 = vmatprep.subr.mxu0 0.0
  %744 = vmatpush1.msra.mxu0 %v195
  %745 = vmatprep.subr.mxu0 0.0
  %746 = vmatpush1.msra.mxu0 %v194
  %747 = vmatprep.subr.mxu0 0.0
  %748 = vmatpush2.msra.mxu0 0.0
  %749 = vmatprep.subr.mxu0 0.0
  %750 = vmatpush2.msra.mxu0 0.0
  %751 = vmatprep.subr.mxu0 0.0
  %752 = vmatpush2.msra.mxu0 0.0
  %753 = vmatprep.subr.mxu0 0.0
  %754 = vmatpush2.msra.mxu0 0.0
  %755 = vmatprep.subr.mxu0 0.0
  %756 = vmatpush2.msra.mxu0 0.0
  %757 = vmatprep.subr.mxu0 0.0
  %758 = vmatpush2.msra.mxu0 0.0
  %759 = vmatprep.subr.mxu0 0.0
  %760 = vmatpush2.msra.mxu0 0.0
  %761 = vmatprep.subr.mxu0 0.0
  %762 = vmatpush2.msra.mxu0 0.0
  %763 = vmatprep.subr.mxu0 0.0
  %764 = vmatpush2.msra.mxu0 0.0
  %765 = vmatprep.subr.mxu0 0.0
  %766 = vmatpush2.msra.mxu0 0.0
  %767 = vmatprep.subr.mxu0 0.0
  %768 = vmatpush2.msra.mxu0 0.0
  %769 = vmatprep.subr.mxu0 0.0
  %770 = vmatpush2.msra.mxu0 0.0
  %771 = vmatprep.subr.mxu0 0.0
  %772 = vmatpush2.msra.mxu0 0.0
  %773 = vmatprep.subr.mxu0 0.0
  %774 = vmatpush2.msra.mxu0 0.0
  %775 = vmatprep.subr.mxu0 0.0
  %776 = vmatpush2.msra.mxu0 0.0
  %777 = vmatprep.subr.mxu0 0.0
  %778 = vmatpush2.msra.mxu0 0.0
  %779 = vmatprep.mubr.f32.mxu0 0.0
  %780 = vmatmul.mubr.f32.gmra.mxu0 %v713
  %v781 = vpop.f32.mrf.mxu0
  %v782 = vadd.f32 0.0, %v781
  %v783 = vpop.f32.mrf.mxu0
  %784 = vdwg.mxu0
  %v785 = vadd.f32 %v179, %v782
  %v786 = vxor.u32 %v785, 2147483648
  %v787 = vmul.f32 %v786, 1.442695
  %v788 = vpow.pop %v787
  %v789 = vadd.f32 %v788, 1.0
  %v790 = vrcp.pop %v789
  %v791 = vmul.f32 1.0, %v790
  %v792 = vtanh.pop %v785
  %v793 = vmul.f32 %v791, %v701
  %795 = vrot.lane.b32.xlu0 %v792, 64
  %v796 = vpop.permute.xlu0 %795
  %v798 = vmul.f32 %v791, %v796
  %800 = vrot.lane.b32.xlu0 %v798, 32
  %v801 = vpop.permute.xlu0 %800
  %v803 = vadd.f32 %v793, %v801
  %v804 = vtanh.pop %v803
  %806 = vrot.lane.b32.xlu0 %v804, 64
  %v807 = vpop.permute.xlu0 %806
  %v809 = vmul.f32 %v791, %v807
  %811 = vrot.lane.b32.xlu0 %v809, 32
  %v812 = vpop.permute.xlu0 %811
  %814 = vst.msk [vmem:[#allocation2 + $0x28] sm:$0xff] %vm62, %v812
  %v815 = vsel %vm62, %v812, 0
  %817 = vmatprep.subr.mxu0 0.0
  %818 = vmatpush1.msra.mxu0 0.0
  %819 = vmatprep.subr.mxu0 0.0
  %820 = vmatpush1.msra.mxu0 0.0
  %821 = vmatprep.subr.mxu0 0.0
  %822 = vmatpush1.msra.mxu0 0.0
  %823 = vmatprep.subr.mxu0 0.0
  %824 = vmatpush1.msra.mxu0 0.0
  %825 = vmatprep.subr.mxu0 0.0
  %826 = vmatpush1.msra.mxu0 0.0
  %827 = vmatprep.subr.mxu0 0.0
  %828 = vmatpush1.msra.mxu0 0.0
  %829 = vmatprep.subr.mxu0 0.0
  %830 = vmatpush1.msra.mxu0 0.0
  %831 = vmatprep.subr.mxu0 0.0
  %832 = vmatpush1.msra.mxu0 0.0
  %833 = vmatprep.subr.mxu0 0.0
  %834 = vmatpush1.msra.mxu0 0.0
  %835 = vmatprep.subr.mxu0 0.0
  %836 = vmatpush1.msra.mxu0 0.0
  %837 = vmatprep.subr.mxu0 0.0
  %838 = vmatpush1.msra.mxu0 0.0
  %839 = vmatprep.subr.mxu0 0.0
  %840 = vmatpush1.msra.mxu0 0.0
  %841 = vmatprep.subr.mxu0 0.0
  %842 = vmatpush1.msra.mxu0 %v197
  %843 = vmatprep.subr.mxu0 0.0
  %844 = vmatpush1.msra.mxu0 %v196
  %845 = vmatprep.subr.mxu0 0.0
  %846 = vmatpush1.msra.mxu0 %v195
  %847 = vmatprep.subr.mxu0 0.0
  %848 = vmatpush1.msra.mxu0 %v194
  %849 = vmatprep.subr.mxu0 0.0
  %850 = vmatpush2.msra.mxu0 0.0
  %851 = vmatprep.subr.mxu0 0.0
  %852 = vmatpush2.msra.mxu0 0.0
  %853 = vmatprep.subr.mxu0 0.0
  %854 = vmatpush2.msra.mxu0 0.0
  %855 = vmatprep.subr.mxu0 0.0
  %856 = vmatpush2.msra.mxu0 0.0
  %857 = vmatprep.subr.mxu0 0.0
  %858 = vmatpush2.msra.mxu0 0.0
  %859 = vmatprep.subr.mxu0 0.0
  %860 = vmatpush2.msra.mxu0 0.0
  %861 = vmatprep.subr.mxu0 0.0
  %862 = vmatpush2.msra.mxu0 0.0
  %863 = vmatprep.subr.mxu0 0.0
  %864 = vmatpush2.msra.mxu0 0.0
  %865 = vmatprep.subr.mxu0 0.0
  %866 = vmatpush2.msra.mxu0 0.0
  %867 = vmatprep.subr.mxu0 0.0
  %868 = vmatpush2.msra.mxu0 0.0
  %869 = vmatprep.subr.mxu0 0.0
  %870 = vmatpush2.msra.mxu0 0.0
  %871 = vmatprep.subr.mxu0 0.0
  %872 = vmatpush2.msra.mxu0 0.0
  %873 = vmatprep.subr.mxu0 0.0
  %874 = vmatpush2.msra.mxu0 0.0
  %875 = vmatprep.subr.mxu0 0.0
  %876 = vmatpush2.msra.mxu0 0.0
  %877 = vmatprep.subr.mxu0 0.0
  %878 = vmatpush2.msra.mxu0 0.0
  %879 = vmatprep.subr.mxu0 0.0
  %880 = vmatpush2.msra.mxu0 0.0
  %881 = vmatprep.mubr.f32.mxu0 0.0
  %882 = vmatmul.mubr.f32.gmra.mxu0 %v815
  %v883 = vpop.f32.mrf.mxu0
  %v884 = vadd.f32 0.0, %v883
  %v885 = vpop.f32.mrf.mxu0
  %886 = vdwg.mxu0
  %v887 = vadd.f32 %v184, %v884
  %v888 = vxor.u32 %v887, 2147483648
  %v889 = vmul.f32 %v888, 1.442695
  %v890 = vpow.pop %v889
  %v891 = vadd.f32 %v890, 1.0
  %v892 = vrcp.pop %v891
  %v893 = vmul.f32 1.0, %v892
  %v894 = vtanh.pop %v887
  %v895 = vmul.f32 %v893, %v803
  %897 = vrot.lane.b32.xlu0 %v894, 64
  %v898 = vpop.permute.xlu0 %897
  %v900 = vmul.f32 %v893, %v898
  %902 = vrot.lane.b32.xlu0 %v900, 32
  %v903 = vpop.permute.xlu0 %902
  %v905 = vadd.f32 %v895, %v903
  %v906 = vtanh.pop %v905
  %908 = vrot.lane.b32.xlu0 %v906, 64
  %v909 = vpop.permute.xlu0 %908
  %v911 = vmul.f32 %v893, %v909
  %913 = vrot.lane.b32.xlu0 %v911, 32
  %v914 = vpop.permute.xlu0 %913
  %916 = vst.msk [vmem:[#allocation2 + $0x30] sm:$0xff] %vm62, %v914
  %v917 = vsel %vm62, %v914, 0
  %919 = vmatprep.subr.mxu0 0.0
  %920 = vmatpush1.msra.mxu0 0.0
  %921 = vmatprep.subr.mxu0 0.0
  %922 = vmatpush1.msra.mxu0 0.0
  %923 = vmatprep.subr.mxu0 0.0
  %924 = vmatpush1.msra.mxu0 0.0
  %925 = vmatprep.subr.mxu0 0.0
  %926 = vmatpush1.msra.mxu0 0.0
  %927 = vmatprep.subr.mxu0 0.0
  %928 = vmatpush1.msra.mxu0 0.0
  %929 = vmatprep.subr.mxu0 0.0
  %930 = vmatpush1.msra.mxu0 0.0
  %931 = vmatprep.subr.mxu0 0.0
  %932 = vmatpush1.msra.mxu0 0.0
  %933 = vmatprep.subr.mxu0 0.0
  %934 = vmatpush1.msra.mxu0 0.0
  %935 = vmatprep.subr.mxu0 0.0
  %936 = vmatpush1.msra.mxu0 0.0
  %937 = vmatprep.subr.mxu0 0.0
  %938 = vmatpush1.msra.mxu0 0.0
  %939 = vmatprep.subr.mxu0 0.0
  %940 = vmatpush1.msra.mxu0 0.0
  %941 = vmatprep.subr.mxu0 0.0
  %942 = vmatpush1.msra.mxu0 0.0
  %943 = vmatprep.subr.mxu0 0.0
  %944 = vmatpush1.msra.mxu0 %v197
  %945 = vmatprep.subr.mxu0 0.0
  %946 = vmatpush1.msra.mxu0 %v196
  %947 = vmatprep.subr.mxu0 0.0
  %948 = vmatpush1.msra.mxu0 %v195
  %949 = vmatprep.subr.mxu0 0.0
  %950 = vmatpush1.msra.mxu0 %v194
  %951 = vmatprep.subr.mxu0 0.0
  %952 = vmatpush2.msra.mxu0 0.0
  %953 = vmatprep.subr.mxu0 0.0
  %954 = vmatpush2.msra.mxu0 0.0
  %955 = vmatprep.subr.mxu0 0.0
  %956 = vmatpush2.msra.mxu0 0.0
  %957 = vmatprep.subr.mxu0 0.0
  %958 = vmatpush2.msra.mxu0 0.0
  %959 = vmatprep.subr.mxu0 0.0
  %960 = vmatpush2.msra.mxu0 0.0
  %961 = vmatprep.subr.mxu0 0.0
  %962 = vmatpush2.msra.mxu0 0.0
  %963 = vmatprep.subr.mxu0 0.0
  %964 = vmatpush2.msra.mxu0 0.0
  %965 = vmatprep.subr.mxu0 0.0
  %966 = vmatpush2.msra.mxu0 0.0
  %967 = vmatprep.subr.mxu0 0.0
  %968 = vmatpush2.msra.mxu0 0.0
  %969 = vmatprep.subr.mxu0 0.0
  %970 = vmatpush2.msra.mxu0 0.0
  %971 = vmatprep.subr.mxu0 0.0
  %972 = vmatpush2.msra.mxu0 0.0
  %973 = vmatprep.subr.mxu0 0.0
  %974 = vmatpush2.msra.mxu0 0.0
  %975 = vmatprep.subr.mxu0 0.0
  %976 = vmatpush2.msra.mxu0 0.0
  %977 = vmatprep.subr.mxu0 0.0
  %978 = vmatpush2.msra.mxu0 0.0
  %979 = vmatprep.subr.mxu0 0.0
  %980 = vmatpush2.msra.mxu0 0.0
  %981 = vmatprep.subr.mxu0 0.0
  %982 = vmatpush2.msra.mxu0 0.0
  %983 = vmatprep.mubr.f32.mxu0 0.0
  %984 = vmatmul.mubr.f32.gmra.mxu0 %v917
  %v985 = vpop.f32.mrf.mxu0
  %v986 = vadd.f32 0.0, %v985
  %v987 = vpop.f32.mrf.mxu0
  %988 = vdwg.mxu0
  %v989 = vadd.f32 %v189, %v986
  %v990 = vxor.u32 %v989, 2147483648
  %v991 = vmul.f32 %v990, 1.442695
  %v992 = vpow.pop %v991
  %v993 = vadd.f32 %v992, 1.0
  %v994 = vrcp.pop %v993
  %v995 = vmul.f32 1.0, %v994
  %v996 = vtanh.pop %v989
  %v997 = vmul.f32 %v995, %v905
  %999 = vrot.lane.b32.xlu0 %v996, 64
  %v1000 = vpop.permute.xlu0 %999
  %v1002 = vmul.f32 %v995, %v1000
  %1004 = vrot.lane.b32.xlu0 %v1002, 32
  %v1005 = vpop.permute.xlu0 %1004
  %v1007 = vadd.f32 %v997, %v1005
  %v1008 = vtanh.pop %v1007
  %1010 = vrot.lane.b32.xlu0 %v1008, 64
  %v1011 = vpop.permute.xlu0 %1010
  %v1013 = vmul.f32 %v995, %v1011
  %1015 = vrot.lane.b32.xlu0 %v1013, 32
  %v1016 = vpop.permute.xlu0 %1015
  %1018 = vst.msk [vmem:[#allocation2 + $0x38] sm:$0xff] %vm62, %v1016
  %v1019 = vld [vmem:[#allocation2] sm:$0xff]
  %v1020 = vld [vmem:[#allocation2 + $0x8] sm:$0xff]
  %v1021 = vld [vmem:[#allocation2 + $0x10] sm:$0xff]
  %v1022 = vld [vmem:[#allocation2 + $0x18] sm:$0xff]
  %v1023 = vld [vmem:[#allocation2 + $0x20] sm:$0xff]
  %v1024 = vld [vmem:[#allocation2 + $0x28] sm:$0xff]
  %v1025 = vld [vmem:[#allocation2 + $0x30] sm:$0xff]
  %v1026 = vld [vmem:[#allocation2 + $0x38] sm:$0xff]
  %v1027 = vld [vmem:[%s4] sm:$0xff]
  %v1028 = vld [vmem:[%s4 + $0x8] sm:$0xff]
  %v1029 = vld [vmem:[%s4 + $0x10] sm:$0xff]
  %v1030 = vld [vmem:[%s4 + $0x18] sm:$0xff]
  %v1031 = vld [vmem:[%s6] sm:$0x1]
  %v1033 = vlaneseq
  %v1034 = vshrl.u32 %v1033, 7
  %v1035 = vsub.s32 0, %v1034
  %v1036 = vrot.slane %v1031, %v1035
  %v1039 = vsel %vm62, %v1019, 0
  %v1042 = vsel %vm62, %v1020, 0
  %v1045 = vsel %vm62, %v1021, 0
  %v1048 = vsel %vm62, %v1022, 0
  %v1051 = vsel %vm62, %v1023, 0
  %v1054 = vsel %vm62, %v1024, 0
  %v1057 = vsel %vm62, %v1025, 0
  %v1060 = vsel %vm62, %v1026, 0
  %1062 = vmatprep.subr.mxu0 0.0
  %1063 = vmatpush1.msra.mxu0 0.0
  %1064 = vmatprep.subr.mxu0 0.0
  %1065 = vmatpush1.msra.mxu0 0.0
  %1066 = vmatprep.subr.mxu0 0.0
  %1067 = vmatpush1.msra.mxu0 0.0
  %1068 = vmatprep.subr.mxu0 0.0
  %1069 = vmatpush1.msra.mxu0 0.0
  %1070 = vmatprep.subr.mxu0 0.0
  %1071 = vmatpush1.msra.mxu0 0.0
  %1072 = vmatprep.subr.mxu0 0.0
  %1073 = vmatpush1.msra.mxu0 0.0
  %1074 = vmatprep.subr.mxu0 0.0
  %1075 = vmatpush1.msra.mxu0 0.0
  %1076 = vmatprep.subr.mxu0 0.0
  %1077 = vmatpush1.msra.mxu0 0.0
  %1078 = vmatprep.subr.mxu0 0.0
  %1079 = vmatpush1.msra.mxu0 0.0
  %1080 = vmatprep.subr.mxu0 0.0
  %1081 = vmatpush1.msra.mxu0 0.0
  %1082 = vmatprep.subr.mxu0 0.0
  %1083 = vmatpush1.msra.mxu0 0.0
  %1084 = vmatprep.subr.mxu0 0.0
  %1085 = vmatpush1.msra.mxu0 0.0
  %1086 = vmatprep.subr.mxu0 0.0
  %1087 = vmatpush1.msra.mxu0 %v1030
  %1088 = vmatprep.subr.mxu0 0.0
  %1089 = vmatpush1.msra.mxu0 %v1029
  %1090 = vmatprep.subr.mxu0 0.0
  %1091 = vmatpush1.msra.mxu0 %v1028
  %1092 = vmatprep.subr.mxu0 0.0
  %1093 = vmatpush1.msra.mxu0 %v1027
  %1094 = vmatprep.subr.mxu0 0.0
  %1095 = vmatpush2.msra.mxu0 0.0
  %1096 = vmatprep.subr.mxu0 0.0
  %1097 = vmatpush2.msra.mxu0 0.0
  %1098 = vmatprep.subr.mxu0 0.0
  %1099 = vmatpush2.msra.mxu0 0.0
  %1100 = vmatprep.subr.mxu0 0.0
  %1101 = vmatpush2.msra.mxu0 0.0
  %1102 = vmatprep.subr.mxu0 0.0
  %1103 = vmatpush2.msra.mxu0 0.0
  %1104 = vmatprep.subr.mxu0 0.0
  %1105 = vmatpush2.msra.mxu0 0.0
  %1106 = vmatprep.subr.mxu0 0.0
  %1107 = vmatpush2.msra.mxu0 0.0
  %1108 = vmatprep.subr.mxu0 0.0
  %1109 = vmatpush2.msra.mxu0 0.0
  %1110 = vmatprep.subr.mxu0 0.0
  %1111 = vmatpush2.msra.mxu0 0.0
  %1112 = vmatprep.subr.mxu0 0.0
  %1113 = vmatpush2.msra.mxu0 0.0
  %1114 = vmatprep.subr.mxu0 0.0
  %1115 = vmatpush2.msra.mxu0 0.0
  %1116 = vmatprep.subr.mxu0 0.0
  %1117 = vmatpush2.msra.mxu0 0.0
  %1118 = vmatprep.subr.mxu0 0.0
  %1119 = vmatpush2.msra.mxu0 0.0
  %1120 = vmatprep.subr.mxu0 0.0
  %1121 = vmatpush2.msra.mxu0 0.0
  %1122 = vmatprep.subr.mxu0 0.0
  %1123 = vmatpush2.msra.mxu0 0.0
  %1124 = vmatprep.subr.mxu0 0.0
  %1125 = vmatpush2.msra.mxu0 0.0
  %1126 = vmatprep.mubr.f32.mxu0 0.0
  %1127 = vmatmul.mubr.f32.gmra.mxu0 %v1039
  %v1128 = vpop.f32.mrf.mxu0
  %v1129 = vadd.f32 %v1036, %v1128
  %v1130 = vpop.f32.mrf.mxu0
  %1131 = vmatprep.mubr.f32.mxu0 0.0
  %1132 = vmatmul.mubr.f32.gmra.mxu0 %v1042
  %v1133 = vpop.f32.mrf.mxu0
  %v1134 = vadd.f32 %v1036, %v1133
  %v1135 = vpop.f32.mrf.mxu0
  %1136 = vmatprep.mubr.f32.mxu0 0.0
  %1137 = vmatmul.mubr.f32.gmra.mxu0 %v1045
  %v1138 = vpop.f32.mrf.mxu0
  %v1139 = vadd.f32 %v1036, %v1138
  %v1140 = vpop.f32.mrf.mxu0
  %1141 = vmatprep.mubr.f32.mxu0 0.0
  %1142 = vmatmul.mubr.f32.gmra.mxu0 %v1048
  %v1143 = vpop.f32.mrf.mxu0
  %v1144 = vadd.f32 %v1036, %v1143
  %v1145 = vpop.f32.mrf.mxu0
  %1146 = vmatprep.mubr.f32.mxu0 0.0
  %1147 = vmatmul.mubr.f32.gmra.mxu0 %v1051
  %v1148 = vpop.f32.mrf.mxu0
  %v1149 = vadd.f32 %v1036, %v1148
  %v1150 = vpop.f32.mrf.mxu0
  %1151 = vmatprep.mubr.f32.mxu0 0.0
  %1152 = vmatmul.mubr.f32.gmra.mxu0 %v1054
  %v1153 = vpop.f32.mrf.mxu0
  %v1154 = vadd.f32 %v1036, %v1153
  %v1155 = vpop.f32.mrf.mxu0
  %1156 = vmatprep.mubr.f32.mxu0 0.0
  %1157 = vmatmul.mubr.f32.gmra.mxu0 %v1057
  %v1158 = vpop.f32.mrf.mxu0
  %v1159 = vadd.f32 %v1036, %v1158
  %v1160 = vpop.f32.mrf.mxu0
  %1161 = vmatprep.mubr.f32.mxu0 0.0
  %1162 = vmatmul.mubr.f32.gmra.mxu0 %v1060
  %v1163 = vpop.f32.mrf.mxu0
  %v1164 = vadd.f32 %v1036, %v1163
  %v1165 = vpop.f32.mrf.mxu0
  %1166 = vdwg.mxu0
  %s1167 = scalar_lea.vmem %s9, 8
  %v1168 = vld [vmem:[%s1167] sm:$0xff]
  %s1169 = scalar_lea.vmem %s10, 8
  %v1170 = vld [vmem:[%s1169] sm:$0xff]
  %v1171 = vld [vmem:[%s5] sm:$0xff]
  %v1172 = vld [vmem:[%s5 + $0x8] sm:$0xff]
  %v1173 = vld [vmem:[%s5 + $0x10] sm:$0xff]
  %v1174 = vld [vmem:[%s5 + $0x18] sm:$0xff]
  %v1176 = vsel %vm62, %v1168, 0
  %1178 = vmatprep.subr.mxu0 0.0
  %1179 = vmatpush1.msra.mxu0 0.0
  %1180 = vmatprep.subr.mxu0 0.0
  %1181 = vmatpush1.msra.mxu0 0.0
  %1182 = vmatprep.subr.mxu0 0.0
  %1183 = vmatpush1.msra.mxu0 0.0
  %1184 = vmatprep.subr.mxu0 0.0
  %1185 = vmatpush1.msra.mxu0 0.0
  %1186 = vmatprep.subr.mxu0 0.0
  %1187 = vmatpush1.msra.mxu0 0.0
  %1188 = vmatprep.subr.mxu0 0.0
  %1189 = vmatpush1.msra.mxu0 0.0
  %1190 = vmatprep.subr.mxu0 0.0
  %1191 = vmatpush1.msra.mxu0 0.0
  %1192 = vmatprep.subr.mxu0 0.0
  %1193 = vmatpush1.msra.mxu0 0.0
  %1194 = vmatprep.subr.mxu0 0.0
  %1195 = vmatpush1.msra.mxu0 0.0
  %1196 = vmatprep.subr.mxu0 0.0
  %1197 = vmatpush1.msra.mxu0 0.0
  %1198 = vmatprep.subr.mxu0 0.0
  %1199 = vmatpush1.msra.mxu0 0.0
  %1200 = vmatprep.subr.mxu0 0.0
  %1201 = vmatpush1.msra.mxu0 0.0
  %1202 = vmatprep.subr.mxu0 0.0
  %1203 = vmatpush1.msra.mxu0 %v1174
  %1204 = vmatprep.subr.mxu0 0.0
  %1205 = vmatpush1.msra.mxu0 %v1173
  %1206 = vmatprep.subr.mxu0 0.0
  %1207 = vmatpush1.msra.mxu0 %v1172
  %1208 = vmatprep.subr.mxu0 0.0
  %1209 = vmatpush1.msra.mxu0 %v1171
  %1210 = vmatprep.subr.mxu0 0.0
  %1211 = vmatpush2.msra.mxu0 0.0
  %1212 = vmatprep.subr.mxu0 0.0
  %1213 = vmatpush2.msra.mxu0 0.0
  %1214 = vmatprep.subr.mxu0 0.0
  %1215 = vmatpush2.msra.mxu0 0.0
  %1216 = vmatprep.subr.mxu0 0.0
  %1217 = vmatpush2.msra.mxu0 0.0
  %1218 = vmatprep.subr.mxu0 0.0
  %1219 = vmatpush2.msra.mxu0 0.0
  %1220 = vmatprep.subr.mxu0 0.0
  %1221 = vmatpush2.msra.mxu0 0.0
  %1222 = vmatprep.subr.mxu0 0.0
  %1223 = vmatpush2.msra.mxu0 0.0
  %1224 = vmatprep.subr.mxu0 0.0
  %1225 = vmatpush2.msra.mxu0 0.0
  %1226 = vmatprep.subr.mxu0 0.0
  %1227 = vmatpush2.msra.mxu0 0.0
  %1228 = vmatprep.subr.mxu0 0.0
  %1229 = vmatpush2.msra.mxu0 0.0
  %1230 = vmatprep.subr.mxu0 0.0
  %1231 = vmatpush2.msra.mxu0 0.0
  %1232 = vmatprep.subr.mxu0 0.0
  %1233 = vmatpush2.msra.mxu0 0.0
  %1234 = vmatprep.subr.mxu0 0.0
  %1235 = vmatpush2.msra.mxu0 0.0
  %1236 = vmatprep.subr.mxu0 0.0
  %1237 = vmatpush2.msra.mxu0 0.0
  %1238 = vmatprep.subr.mxu0 0.0
  %1239 = vmatpush2.msra.mxu0 0.0
  %1240 = vmatprep.subr.mxu0 0.0
  %1241 = vmatpush2.msra.mxu0 0.0
  %1242 = vmatprep.mubr.f32.mxu0 0.0
  %1243 = vmatmul.mubr.f32.gmra.mxu0 %v1176
  %v1244 = vpop.f32.mrf.mxu0
  %v1245 = vadd.f32 0.0, %v1244
  %v1246 = vpop.f32.mrf.mxu0
  %1247 = vdwg.mxu0
  %v1248 = vadd.f32 %v1129, %v1245
  %v1249 = vxor.u32 %v1248, 2147483648
  %v1250 = vmul.f32 %v1249, 1.442695
  %v1251 = vpow.pop %v1250
  %v1252 = vadd.f32 %v1251, 1.0
  %v1253 = vrcp.pop %v1252
  %v1254 = vmul.f32 1.0, %v1253
  %v1255 = vtanh.pop %v1248
  %1257 = vrot.lane.b32.xlu0 %v1170, 32
  %v1258 = vpop.permute.xlu0 %1257
  %v1260 = vmul.f32 %v1254, %v1258
  %1262 = vrot.lane.b32.xlu0 %v1255, 64
  %v1263 = vpop.permute.xlu0 %1262
  %v1265 = vmul.f32 %v1254, %v1263
  %1267 = vrot.lane.b32.xlu0 %v1265, 32
  %v1268 = vpop.permute.xlu0 %1267
  %v1270 = vadd.f32 %v1260, %v1268
  %v1271 = vtanh.pop %v1270
  %1273 = vrot.lane.b32.xlu0 %v1271, 64
  %v1274 = vpop.permute.xlu0 %1273
  %v1276 = vmul.f32 %v1254, %v1274
  %1278 = vrot.lane.b32.xlu0 %v1276, 32
  %v1279 = vpop.permute.xlu0 %1278
  %v1280 = vsel %vm62, %v1279, 0
  %1282 = vmatprep.subr.mxu0 0.0
  %1283 = vmatpush1.msra.mxu0 0.0
  %1284 = vmatprep.subr.mxu0 0.0
  %1285 = vmatpush1.msra.mxu0 0.0
  %1286 = vmatprep.subr.mxu0 0.0
  %1287 = vmatpush1.msra.mxu0 0.0
  %1288 = vmatprep.subr.mxu0 0.0
  %1289 = vmatpush1.msra.mxu0 0.0
  %1290 = vmatprep.subr.mxu0 0.0
  %1291 = vmatpush1.msra.mxu0 0.0
  %1292 = vmatprep.subr.mxu0 0.0
  %1293 = vmatpush1.msra.mxu0 0.0
  %1294 = vmatprep.subr.mxu0 0.0
  %1295 = vmatpush1.msra.mxu0 0.0
  %1296 = vmatprep.subr.mxu0 0.0
  %1297 = vmatpush1.msra.mxu0 0.0
  %1298 = vmatprep.subr.mxu0 0.0
  %1299 = vmatpush1.msra.mxu0 0.0
  %1300 = vmatprep.subr.mxu0 0.0
  %1301 = vmatpush1.msra.mxu0 0.0
  %1302 = vmatprep.subr.mxu0 0.0
  %1303 = vmatpush1.msra.mxu0 0.0
  %1304 = vmatprep.subr.mxu0 0.0
  %1305 = vmatpush1.msra.mxu0 0.0
  %1306 = vmatprep.subr.mxu0 0.0
  %1307 = vmatpush1.msra.mxu0 %v1174
  %1308 = vmatprep.subr.mxu0 0.0
  %1309 = vmatpush1.msra.mxu0 %v1173
  %1310 = vmatprep.subr.mxu0 0.0
  %1311 = vmatpush1.msra.mxu0 %v1172
  %1312 = vmatprep.subr.mxu0 0.0
  %1313 = vmatpush1.msra.mxu0 %v1171
  %1314 = vmatprep.subr.mxu0 0.0
  %1315 = vmatpush2.msra.mxu0 0.0
  %1316 = vmatprep.subr.mxu0 0.0
  %1317 = vmatpush2.msra.mxu0 0.0
  %1318 = vmatprep.subr.mxu0 0.0
  %1319 = vmatpush2.msra.mxu0 0.0
  %1320 = vmatprep.subr.mxu0 0.0
  %1321 = vmatpush2.msra.mxu0 0.0
  %1322 = vmatprep.subr.mxu0 0.0
  %1323 = vmatpush2.msra.mxu0 0.0
  %1324 = vmatprep.subr.mxu0 0.0
  %1325 = vmatpush2.msra.mxu0 0.0
  %1326 = vmatprep.subr.mxu0 0.0
  %1327 = vmatpush2.msra.mxu0 0.0
  %1328 = vmatprep.subr.mxu0 0.0
  %1329 = vmatpush2.msra.mxu0 0.0
  %1330 = vmatprep.subr.mxu0 0.0
  %1331 = vmatpush2.msra.mxu0 0.0
  %1332 = vmatprep.subr.mxu0 0.0
  %1333 = vmatpush2.msra.mxu0 0.0
  %1334 = vmatprep.subr.mxu0 0.0
  %1335 = vmatpush2.msra.mxu0 0.0
  %1336 = vmatprep.subr.mxu0 0.0
  %1337 = vmatpush2.msra.mxu0 0.0
  %1338 = vmatprep.subr.mxu0 0.0
  %1339 = vmatpush2.msra.mxu0 0.0
  %1340 = vmatprep.subr.mxu0 0.0
  %1341 = vmatpush2.msra.mxu0 0.0
  %1342 = vmatprep.subr.mxu0 0.0
  %1343 = vmatpush2.msra.mxu0 0.0
  %1344 = vmatprep.subr.mxu0 0.0
  %1345 = vmatpush2.msra.mxu0 0.0
  %1346 = vmatprep.mubr.f32.mxu0 0.0
  %1347 = vmatmul.mubr.f32.gmra.mxu0 %v1280
  %v1348 = vpop.f32.mrf.mxu0
  %v1349 = vadd.f32 0.0, %v1348
  %v1350 = vpop.f32.mrf.mxu0
  %1351 = vdwg.mxu0
  %v1352 = vadd.f32 %v1134, %v1349
  %v1353 = vxor.u32 %v1352, 2147483648
  %v1354 = vmul.f32 %v1353, 1.442695
  %v1355 = vpow.pop %v1354
  %v1356 = vadd.f32 %v1355, 1.0
  %v1357 = vrcp.pop %v1356
  %v1358 = vmul.f32 1.0, %v1357
  %v1359 = vtanh.pop %v1352
  %v1360 = vmul.f32 %v1358, %v1270
  %1362 = vrot.lane.b32.xlu0 %v1359, 64
  %v1363 = vpop.permute.xlu0 %1362
  %v1365 = vmul.f32 %v1358, %v1363
  %1367 = vrot.lane.b32.xlu0 %v1365, 32
  %v1368 = vpop.permute.xlu0 %1367
  %v1370 = vadd.f32 %v1360, %v1368
  %v1371 = vtanh.pop %v1370
  %1373 = vrot.lane.b32.xlu0 %v1371, 64
  %v1374 = vpop.permute.xlu0 %1373
  %v1376 = vmul.f32 %v1358, %v1374
  %1378 = vrot.lane.b32.xlu0 %v1376, 32
  %v1379 = vpop.permute.xlu0 %1378
  %v1380 = vsel %vm62, %v1379, 0
  %1382 = vmatprep.subr.mxu0 0.0
  %1383 = vmatpush1.msra.mxu0 0.0
  %1384 = vmatprep.subr.mxu0 0.0
  %1385 = vmatpush1.msra.mxu0 0.0
  %1386 = vmatprep.subr.mxu0 0.0
  %1387 = vmatpush1.msra.mxu0 0.0
  %1388 = vmatprep.subr.mxu0 0.0
  %1389 = vmatpush1.msra.mxu0 0.0
  %1390 = vmatprep.subr.mxu0 0.0
  %1391 = vmatpush1.msra.mxu0 0.0
  %1392 = vmatprep.subr.mxu0 0.0
  %1393 = vmatpush1.msra.mxu0 0.0
  %1394 = vmatprep.subr.mxu0 0.0
  %1395 = vmatpush1.msra.mxu0 0.0
  %1396 = vmatprep.subr.mxu0 0.0
  %1397 = vmatpush1.msra.mxu0 0.0
  %1398 = vmatprep.subr.mxu0 0.0
  %1399 = vmatpush1.msra.mxu0 0.0
  %1400 = vmatprep.subr.mxu0 0.0
  %1401 = vmatpush1.msra.mxu0 0.0
  %1402 = vmatprep.subr.mxu0 0.0
  %1403 = vmatpush1.msra.mxu0 0.0
  %1404 = vmatprep.subr.mxu0 0.0
  %1405 = vmatpush1.msra.mxu0 0.0
  %1406 = vmatprep.subr.mxu0 0.0
  %1407 = vmatpush1.msra.mxu0 %v1174
  %1408 = vmatprep.subr.mxu0 0.0
  %1409 = vmatpush1.msra.mxu0 %v1173
  %1410 = vmatprep.subr.mxu0 0.0
  %1411 = vmatpush1.msra.mxu0 %v1172
  %1412 = vmatprep.subr.mxu0 0.0
  %1413 = vmatpush1.msra.mxu0 %v1171
  %1414 = vmatprep.subr.mxu0 0.0
  %1415 = vmatpush2.msra.mxu0 0.0
  %1416 = vmatprep.subr.mxu0 0.0
  %1417 = vmatpush2.msra.mxu0 0.0
  %1418 = vmatprep.subr.mxu0 0.0
  %1419 = vmatpush2.msra.mxu0 0.0
  %1420 = vmatprep.subr.mxu0 0.0
  %1421 = vmatpush2.msra.mxu0 0.0
  %1422 = vmatprep.subr.mxu0 0.0
  %1423 = vmatpush2.msra.mxu0 0.0
  %1424 = vmatprep.subr.mxu0 0.0
  %1425 = vmatpush2.msra.mxu0 0.0
  %1426 = vmatprep.subr.mxu0 0.0
  %1427 = vmatpush2.msra.mxu0 0.0
  %1428 = vmatprep.subr.mxu0 0.0
  %1429 = vmatpush2.msra.mxu0 0.0
  %1430 = vmatprep.subr.mxu0 0.0
  %1431 = vmatpush2.msra.mxu0 0.0
  %1432 = vmatprep.subr.mxu0 0.0
  %1433 = vmatpush2.msra.mxu0 0.0
  %1434 = vmatprep.subr.mxu0 0.0
  %1435 = vmatpush2.msra.mxu0 0.0
  %1436 = vmatprep.subr.mxu0 0.0
  %1437 = vmatpush2.msra.mxu0 0.0
  %1438 = vmatprep.subr.mxu0 0.0
  %1439 = vmatpush2.msra.mxu0 0.0
  %1440 = vmatprep.subr.mxu0 0.0
  %1441 = vmatpush2.msra.mxu0 0.0
  %1442 = vmatprep.subr.mxu0 0.0
  %1443 = vmatpush2.msra.mxu0 0.0
  %1444 = vmatprep.subr.mxu0 0.0
  %1445 = vmatpush2.msra.mxu0 0.0
  %1446 = vmatprep.mubr.f32.mxu0 0.0
  %1447 = vmatmul.mubr.f32.gmra.mxu0 %v1380
  %v1448 = vpop.f32.mrf.mxu0
  %v1449 = vadd.f32 0.0, %v1448
  %v1450 = vpop.f32.mrf.mxu0
  %1451 = vdwg.mxu0
  %v1452 = vadd.f32 %v1139, %v1449
  %v1453 = vxor.u32 %v1452, 2147483648
  %v1454 = vmul.f32 %v1453, 1.442695
  %v1455 = vpow.pop %v1454
  %v1456 = vadd.f32 %v1455, 1.0
  %v1457 = vrcp.pop %v1456
  %v1458 = vmul.f32 1.0, %v1457
  %v1459 = vtanh.pop %v1452
  %v1460 = vmul.f32 %v1458, %v1370
  %1462 = vrot.lane.b32.xlu0 %v1459, 64
  %v1463 = vpop.permute.xlu0 %1462
  %v1465 = vmul.f32 %v1458, %v1463
  %1467 = vrot.lane.b32.xlu0 %v1465, 32
  %v1468 = vpop.permute.xlu0 %1467
  %v1470 = vadd.f32 %v1460, %v1468
  %v1471 = vtanh.pop %v1470
  %1473 = vrot.lane.b32.xlu0 %v1471, 64
  %v1474 = vpop.permute.xlu0 %1473
  %v1476 = vmul.f32 %v1458, %v1474
  %1478 = vrot.lane.b32.xlu0 %v1476, 32
  %v1479 = vpop.permute.xlu0 %1478
  %v1480 = vsel %vm62, %v1479, 0
  %1482 = vmatprep.subr.mxu0 0.0
  %1483 = vmatpush1.msra.mxu0 0.0
  %1484 = vmatprep.subr.mxu0 0.0
  %1485 = vmatpush1.msra.mxu0 0.0
  %1486 = vmatprep.subr.mxu0 0.0
  %1487 = vmatpush1.msra.mxu0 0.0
  %1488 = vmatprep.subr.mxu0 0.0
  %1489 = vmatpush1.msra.mxu0 0.0
  %1490 = vmatprep.subr.mxu0 0.0
  %1491 = vmatpush1.msra.mxu0 0.0
  %1492 = vmatprep.subr.mxu0 0.0
  %1493 = vmatpush1.msra.mxu0 0.0
  %1494 = vmatprep.subr.mxu0 0.0
  %1495 = vmatpush1.msra.mxu0 0.0
  %1496 = vmatprep.subr.mxu0 0.0
  %1497 = vmatpush1.msra.mxu0 0.0
  %1498 = vmatprep.subr.mxu0 0.0
  %1499 = vmatpush1.msra.mxu0 0.0
  %1500 = vmatprep.subr.mxu0 0.0
  %1501 = vmatpush1.msra.mxu0 0.0
  %1502 = vmatprep.subr.mxu0 0.0
  %1503 = vmatpush1.msra.mxu0 0.0
  %1504 = vmatprep.subr.mxu0 0.0
  %1505 = vmatpush1.msra.mxu0 0.0
  %1506 = vmatprep.subr.mxu0 0.0
  %1507 = vmatpush1.msra.mxu0 %v1174
  %1508 = vmatprep.subr.mxu0 0.0
  %1509 = vmatpush1.msra.mxu0 %v1173
  %1510 = vmatprep.subr.mxu0 0.0
  %1511 = vmatpush1.msra.mxu0 %v1172
  %1512 = vmatprep.subr.mxu0 0.0
  %1513 = vmatpush1.msra.mxu0 %v1171
  %1514 = vmatprep.subr.mxu0 0.0
  %1515 = vmatpush2.msra.mxu0 0.0
  %1516 = vmatprep.subr.mxu0 0.0
  %1517 = vmatpush2.msra.mxu0 0.0
  %1518 = vmatprep.subr.mxu0 0.0
  %1519 = vmatpush2.msra.mxu0 0.0
  %1520 = vmatprep.subr.mxu0 0.0
  %1521 = vmatpush2.msra.mxu0 0.0
  %1522 = vmatprep.subr.mxu0 0.0
  %1523 = vmatpush2.msra.mxu0 0.0
  %1524 = vmatprep.subr.mxu0 0.0
  %1525 = vmatpush2.msra.mxu0 0.0
  %1526 = vmatprep.subr.mxu0 0.0
  %1527 = vmatpush2.msra.mxu0 0.0
  %1528 = vmatprep.subr.mxu0 0.0
  %1529 = vmatpush2.msra.mxu0 0.0
  %1530 = vmatprep.subr.mxu0 0.0
  %1531 = vmatpush2.msra.mxu0 0.0
  %1532 = vmatprep.subr.mxu0 0.0
  %1533 = vmatpush2.msra.mxu0 0.0
  %1534 = vmatprep.subr.mxu0 0.0
  %1535 = vmatpush2.msra.mxu0 0.0
  %1536 = vmatprep.subr.mxu0 0.0
  %1537 = vmatpush2.msra.mxu0 0.0
  %1538 = vmatprep.subr.mxu0 0.0
  %1539 = vmatpush2.msra.mxu0 0.0
  %1540 = vmatprep.subr.mxu0 0.0
  %1541 = vmatpush2.msra.mxu0 0.0
  %1542 = vmatprep.subr.mxu0 0.0
  %1543 = vmatpush2.msra.mxu0 0.0
  %1544 = vmatprep.subr.mxu0 0.0
  %1545 = vmatpush2.msra.mxu0 0.0
  %1546 = vmatprep.mubr.f32.mxu0 0.0
  %1547 = vmatmul.mubr.f32.gmra.mxu0 %v1480
  %v1548 = vpop.f32.mrf.mxu0
  %v1549 = vadd.f32 0.0, %v1548
  %v1550 = vpop.f32.mrf.mxu0
  %1551 = vdwg.mxu0
  %v1552 = vadd.f32 %v1144, %v1549
  %v1553 = vxor.u32 %v1552, 2147483648
  %v1554 = vmul.f32 %v1553, 1.442695
  %v1555 = vpow.pop %v1554
  %v1556 = vadd.f32 %v1555, 1.0
  %v1557 = vrcp.pop %v1556
  %v1558 = vmul.f32 1.0, %v1557
  %v1559 = vtanh.pop %v1552
  %v1560 = vmul.f32 %v1558, %v1470
  %1562 = vrot.lane.b32.xlu0 %v1559, 64
  %v1563 = vpop.permute.xlu0 %1562
  %v1565 = vmul.f32 %v1558, %v1563
  %1567 = vrot.lane.b32.xlu0 %v1565, 32
  %v1568 = vpop.permute.xlu0 %1567
  %v1570 = vadd.f32 %v1560, %v1568
  %v1571 = vtanh.pop %v1570
  %1573 = vrot.lane.b32.xlu0 %v1571, 64
  %v1574 = vpop.permute.xlu0 %1573
  %v1576 = vmul.f32 %v1558, %v1574
  %1578 = vrot.lane.b32.xlu0 %v1576, 32
  %v1579 = vpop.permute.xlu0 %1578
  %v1580 = vsel %vm62, %v1579, 0
  %1582 = vmatprep.subr.mxu0 0.0
  %1583 = vmatpush1.msra.mxu0 0.0
  %1584 = vmatprep.subr.mxu0 0.0
  %1585 = vmatpush1.msra.mxu0 0.0
  %1586 = vmatprep.subr.mxu0 0.0
  %1587 = vmatpush1.msra.mxu0 0.0
  %1588 = vmatprep.subr.mxu0 0.0
  %1589 = vmatpush1.msra.mxu0 0.0
  %1590 = vmatprep.subr.mxu0 0.0
  %1591 = vmatpush1.msra.mxu0 0.0
  %1592 = vmatprep.subr.mxu0 0.0
  %1593 = vmatpush1.msra.mxu0 0.0
  %1594 = vmatprep.subr.mxu0 0.0
  %1595 = vmatpush1.msra.mxu0 0.0
  %1596 = vmatprep.subr.mxu0 0.0
  %1597 = vmatpush1.msra.mxu0 0.0
  %1598 = vmatprep.subr.mxu0 0.0
  %1599 = vmatpush1.msra.mxu0 0.0
  %1600 = vmatprep.subr.mxu0 0.0
  %1601 = vmatpush1.msra.mxu0 0.0
  %1602 = vmatprep.subr.mxu0 0.0
  %1603 = vmatpush1.msra.mxu0 0.0
  %1604 = vmatprep.subr.mxu0 0.0
  %1605 = vmatpush1.msra.mxu0 0.0
  %1606 = vmatprep.subr.mxu0 0.0
  %1607 = vmatpush1.msra.mxu0 %v1174
  %1608 = vmatprep.subr.mxu0 0.0
  %1609 = vmatpush1.msra.mxu0 %v1173
  %1610 = vmatprep.subr.mxu0 0.0
  %1611 = vmatpush1.msra.mxu0 %v1172
  %1612 = vmatprep.subr.mxu0 0.0
  %1613 = vmatpush1.msra.mxu0 %v1171
  %1614 = vmatprep.subr.mxu0 0.0
  %1615 = vmatpush2.msra.mxu0 0.0
  %1616 = vmatprep.subr.mxu0 0.0
  %1617 = vmatpush2.msra.mxu0 0.0
  %1618 = vmatprep.subr.mxu0 0.0
  %1619 = vmatpush2.msra.mxu0 0.0
  %1620 = vmatprep.subr.mxu0 0.0
  %1621 = vmatpush2.msra.mxu0 0.0
  %1622 = vmatprep.subr.mxu0 0.0
  %1623 = vmatpush2.msra.mxu0 0.0
  %1624 = vmatprep.subr.mxu0 0.0
  %1625 = vmatpush2.msra.mxu0 0.0
  %1626 = vmatprep.subr.mxu0 0.0
  %1627 = vmatpush2.msra.mxu0 0.0
  %1628 = vmatprep.subr.mxu0 0.0
  %1629 = vmatpush2.msra.mxu0 0.0
  %1630 = vmatprep.subr.mxu0 0.0
  %1631 = vmatpush2.msra.mxu0 0.0
  %1632 = vmatprep.subr.mxu0 0.0
  %1633 = vmatpush2.msra.mxu0 0.0
  %1634 = vmatprep.subr.mxu0 0.0
  %1635 = vmatpush2.msra.mxu0 0.0
  %1636 = vmatprep.subr.mxu0 0.0
  %1637 = vmatpush2.msra.mxu0 0.0
  %1638 = vmatprep.subr.mxu0 0.0
  %1639 = vmatpush2.msra.mxu0 0.0
  %1640 = vmatprep.subr.mxu0 0.0
  %1641 = vmatpush2.msra.mxu0 0.0
  %1642 = vmatprep.subr.mxu0 0.0
  %1643 = vmatpush2.msra.mxu0 0.0
  %1644 = vmatprep.subr.mxu0 0.0
  %1645 = vmatpush2.msra.mxu0 0.0
  %1646 = vmatprep.mubr.f32.mxu0 0.0
  %1647 = vmatmul.mubr.f32.gmra.mxu0 %v1580
  %v1648 = vpop.f32.mrf.mxu0
  %v1649 = vadd.f32 0.0, %v1648
  %v1650 = vpop.f32.mrf.mxu0
  %1651 = vdwg.mxu0
  %v1652 = vadd.f32 %v1149, %v1649
  %v1653 = vxor.u32 %v1652, 2147483648
  %v1654 = vmul.f32 %v1653, 1.442695
  %v1655 = vpow.pop %v1654
  %v1656 = vadd.f32 %v1655, 1.0
  %v1657 = vrcp.pop %v1656
  %v1658 = vmul.f32 1.0, %v1657
  %v1659 = vtanh.pop %v1652
  %v1660 = vmul.f32 %v1658, %v1570
  %1662 = vrot.lane.b32.xlu0 %v1659, 64
  %v1663 = vpop.permute.xlu0 %1662
  %v1665 = vmul.f32 %v1658, %v1663
  %1667 = vrot.lane.b32.xlu0 %v1665, 32
  %v1668 = vpop.permute.xlu0 %1667
  %v1670 = vadd.f32 %v1660, %v1668
  %v1671 = vtanh.pop %v1670
  %1673 = vrot.lane.b32.xlu0 %v1671, 64
  %v1674 = vpop.permute.xlu0 %1673
  %v1676 = vmul.f32 %v1658, %v1674
  %1678 = vrot.lane.b32.xlu0 %v1676, 32
  %v1679 = vpop.permute.xlu0 %1678
  %v1680 = vsel %vm62, %v1679, 0
  %1682 = vmatprep.subr.mxu0 0.0
  %1683 = vmatpush1.msra.mxu0 0.0
  %1684 = vmatprep.subr.mxu0 0.0
  %1685 = vmatpush1.msra.mxu0 0.0
  %1686 = vmatprep.subr.mxu0 0.0
  %1687 = vmatpush1.msra.mxu0 0.0
  %1688 = vmatprep.subr.mxu0 0.0
  %1689 = vmatpush1.msra.mxu0 0.0
  %1690 = vmatprep.subr.mxu0 0.0
  %1691 = vmatpush1.msra.mxu0 0.0
  %1692 = vmatprep.subr.mxu0 0.0
  %1693 = vmatpush1.msra.mxu0 0.0
  %1694 = vmatprep.subr.mxu0 0.0
  %1695 = vmatpush1.msra.mxu0 0.0
  %1696 = vmatprep.subr.mxu0 0.0
  %1697 = vmatpush1.msra.mxu0 0.0
  %1698 = vmatprep.subr.mxu0 0.0
  %1699 = vmatpush1.msra.mxu0 0.0
  %1700 = vmatprep.subr.mxu0 0.0
  %1701 = vmatpush1.msra.mxu0 0.0
  %1702 = vmatprep.subr.mxu0 0.0
  %1703 = vmatpush1.msra.mxu0 0.0
  %1704 = vmatprep.subr.mxu0 0.0
  %1705 = vmatpush1.msra.mxu0 0.0
  %1706 = vmatprep.subr.mxu0 0.0
  %1707 = vmatpush1.msra.mxu0 %v1174
  %1708 = vmatprep.subr.mxu0 0.0
  %1709 = vmatpush1.msra.mxu0 %v1173
  %1710 = vmatprep.subr.mxu0 0.0
  %1711 = vmatpush1.msra.mxu0 %v1172
  %1712 = vmatprep.subr.mxu0 0.0
  %1713 = vmatpush1.msra.mxu0 %v1171
  %1714 = vmatprep.subr.mxu0 0.0
  %1715 = vmatpush2.msra.mxu0 0.0
  %1716 = vmatprep.subr.mxu0 0.0
  %1717 = vmatpush2.msra.mxu0 0.0
  %1718 = vmatprep.subr.mxu0 0.0
  %1719 = vmatpush2.msra.mxu0 0.0
  %1720 = vmatprep.subr.mxu0 0.0
  %1721 = vmatpush2.msra.mxu0 0.0
  %1722 = vmatprep.subr.mxu0 0.0
  %1723 = vmatpush2.msra.mxu0 0.0
  %1724 = vmatprep.subr.mxu0 0.0
  %1725 = vmatpush2.msra.mxu0 0.0
  %1726 = vmatprep.subr.mxu0 0.0
  %1727 = vmatpush2.msra.mxu0 0.0
  %1728 = vmatprep.subr.mxu0 0.0
  %1729 = vmatpush2.msra.mxu0 0.0
  %1730 = vmatprep.subr.mxu0 0.0
  %1731 = vmatpush2.msra.mxu0 0.0
  %1732 = vmatprep.subr.mxu0 0.0
  %1733 = vmatpush2.msra.mxu0 0.0
  %1734 = vmatprep.subr.mxu0 0.0
  %1735 = vmatpush2.msra.mxu0 0.0
  %1736 = vmatprep.subr.mxu0 0.0
  %1737 = vmatpush2.msra.mxu0 0.0
  %1738 = vmatprep.subr.mxu0 0.0
  %1739 = vmatpush2.msra.mxu0 0.0
  %1740 = vmatprep.subr.mxu0 0.0
  %1741 = vmatpush2.msra.mxu0 0.0
  %1742 = vmatprep.subr.mxu0 0.0
  %1743 = vmatpush2.msra.mxu0 0.0
  %1744 = vmatprep.subr.mxu0 0.0
  %1745 = vmatpush2.msra.mxu0 0.0
  %1746 = vmatprep.mubr.f32.mxu0 0.0
  %1747 = vmatmul.mubr.f32.gmra.mxu0 %v1680
  %v1748 = vpop.f32.mrf.mxu0
  %v1749 = vadd.f32 0.0, %v1748
  %v1750 = vpop.f32.mrf.mxu0
  %1751 = vdwg.mxu0
  %v1752 = vadd.f32 %v1154, %v1749
  %v1753 = vxor.u32 %v1752, 2147483648
  %v1754 = vmul.f32 %v1753, 1.442695
  %v1755 = vpow.pop %v1754
  %v1756 = vadd.f32 %v1755, 1.0
  %v1757 = vrcp.pop %v1756
  %v1758 = vmul.f32 1.0, %v1757
  %v1759 = vtanh.pop %v1752
  %v1760 = vmul.f32 %v1758, %v1670
  %1762 = vrot.lane.b32.xlu0 %v1759, 64
  %v1763 = vpop.permute.xlu0 %1762
  %v1765 = vmul.f32 %v1758, %v1763
  %1767 = vrot.lane.b32.xlu0 %v1765, 32
  %v1768 = vpop.permute.xlu0 %1767
  %v1770 = vadd.f32 %v1760, %v1768
  %v1771 = vtanh.pop %v1770
  %1773 = vrot.lane.b32.xlu0 %v1771, 64
  %v1774 = vpop.permute.xlu0 %1773
  %v1776 = vmul.f32 %v1758, %v1774
  %1778 = vrot.lane.b32.xlu0 %v1776, 32
  %v1779 = vpop.permute.xlu0 %1778
  %v1780 = vsel %vm62, %v1779, 0
  %1782 = vmatprep.subr.mxu0 0.0
  %1783 = vmatpush1.msra.mxu0 0.0
  %1784 = vmatprep.subr.mxu0 0.0
  %1785 = vmatpush1.msra.mxu0 0.0
  %1786 = vmatprep.subr.mxu0 0.0
  %1787 = vmatpush1.msra.mxu0 0.0
  %1788 = vmatprep.subr.mxu0 0.0
  %1789 = vmatpush1.msra.mxu0 0.0
  %1790 = vmatprep.subr.mxu0 0.0
  %1791 = vmatpush1.msra.mxu0 0.0
  %1792 = vmatprep.subr.mxu0 0.0
  %1793 = vmatpush1.msra.mxu0 0.0
  %1794 = vmatprep.subr.mxu0 0.0
  %1795 = vmatpush1.msra.mxu0 0.0
  %1796 = vmatprep.subr.mxu0 0.0
  %1797 = vmatpush1.msra.mxu0 0.0
  %1798 = vmatprep.subr.mxu0 0.0
  %1799 = vmatpush1.msra.mxu0 0.0
  %1800 = vmatprep.subr.mxu0 0.0
  %1801 = vmatpush1.msra.mxu0 0.0
  %1802 = vmatprep.subr.mxu0 0.0
  %1803 = vmatpush1.msra.mxu0 0.0
  %1804 = vmatprep.subr.mxu0 0.0
  %1805 = vmatpush1.msra.mxu0 0.0
  %1806 = vmatprep.subr.mxu0 0.0
  %1807 = vmatpush1.msra.mxu0 %v1174
  %1808 = vmatprep.subr.mxu0 0.0
  %1809 = vmatpush1.msra.mxu0 %v1173
  %1810 = vmatprep.subr.mxu0 0.0
  %1811 = vmatpush1.msra.mxu0 %v1172
  %1812 = vmatprep.subr.mxu0 0.0
  %1813 = vmatpush1.msra.mxu0 %v1171
  %1814 = vmatprep.subr.mxu0 0.0
  %1815 = vmatpush2.msra.mxu0 0.0
  %1816 = vmatprep.subr.mxu0 0.0
  %1817 = vmatpush2.msra.mxu0 0.0
  %1818 = vmatprep.subr.mxu0 0.0
  %1819 = vmatpush2.msra.mxu0 0.0
  %1820 = vmatprep.subr.mxu0 0.0
  %1821 = vmatpush2.msra.mxu0 0.0
  %1822 = vmatprep.subr.mxu0 0.0
  %1823 = vmatpush2.msra.mxu0 0.0
  %1824 = vmatprep.subr.mxu0 0.0
  %1825 = vmatpush2.msra.mxu0 0.0
  %1826 = vmatprep.subr.mxu0 0.0
  %1827 = vmatpush2.msra.mxu0 0.0
  %1828 = vmatprep.subr.mxu0 0.0
  %1829 = vmatpush2.msra.mxu0 0.0
  %1830 = vmatprep.subr.mxu0 0.0
  %1831 = vmatpush2.msra.mxu0 0.0
  %1832 = vmatprep.subr.mxu0 0.0
  %1833 = vmatpush2.msra.mxu0 0.0
  %1834 = vmatprep.subr.mxu0 0.0
  %1835 = vmatpush2.msra.mxu0 0.0
  %1836 = vmatprep.subr.mxu0 0.0
  %1837 = vmatpush2.msra.mxu0 0.0
  %1838 = vmatprep.subr.mxu0 0.0
  %1839 = vmatpush2.msra.mxu0 0.0
  %1840 = vmatprep.subr.mxu0 0.0
  %1841 = vmatpush2.msra.mxu0 0.0
  %1842 = vmatprep.subr.mxu0 0.0
  %1843 = vmatpush2.msra.mxu0 0.0
  %1844 = vmatprep.subr.mxu0 0.0
  %1845 = vmatpush2.msra.mxu0 0.0
  %1846 = vmatprep.mubr.f32.mxu0 0.0
  %1847 = vmatmul.mubr.f32.gmra.mxu0 %v1780
  %v1848 = vpop.f32.mrf.mxu0
  %v1849 = vadd.f32 0.0, %v1848
  %v1850 = vpop.f32.mrf.mxu0
  %1851 = vdwg.mxu0
  %v1852 = vadd.f32 %v1159, %v1849
  %v1853 = vxor.u32 %v1852, 2147483648
  %v1854 = vmul.f32 %v1853, 1.442695
  %v1855 = vpow.pop %v1854
  %v1856 = vadd.f32 %v1855, 1.0
  %v1857 = vrcp.pop %v1856
  %v1858 = vmul.f32 1.0, %v1857
  %v1859 = vtanh.pop %v1852
  %v1860 = vmul.f32 %v1858, %v1770
  %1862 = vrot.lane.b32.xlu0 %v1859, 64
  %v1863 = vpop.permute.xlu0 %1862
  %v1865 = vmul.f32 %v1858, %v1863
  %1867 = vrot.lane.b32.xlu0 %v1865, 32
  %v1868 = vpop.permute.xlu0 %1867
  %v1870 = vadd.f32 %v1860, %v1868
  %v1871 = vtanh.pop %v1870
  %1873 = vrot.lane.b32.xlu0 %v1871, 64
  %v1874 = vpop.permute.xlu0 %1873
  %v1876 = vmul.f32 %v1858, %v1874
  %1878 = vrot.lane.b32.xlu0 %v1876, 32
  %v1879 = vpop.permute.xlu0 %1878
  %v1880 = vsel %vm62, %v1879, 0
  %1882 = vmatprep.subr.mxu0 0.0
  %1883 = vmatpush1.msra.mxu0 0.0
  %1884 = vmatprep.subr.mxu0 0.0
  %1885 = vmatpush1.msra.mxu0 0.0
  %1886 = vmatprep.subr.mxu0 0.0
  %1887 = vmatpush1.msra.mxu0 0.0
  %1888 = vmatprep.subr.mxu0 0.0
  %1889 = vmatpush1.msra.mxu0 0.0
  %1890 = vmatprep.subr.mxu0 0.0
  %1891 = vmatpush1.msra.mxu0 0.0
  %1892 = vmatprep.subr.mxu0 0.0
  %1893 = vmatpush1.msra.mxu0 0.0
  %1894 = vmatprep.subr.mxu0 0.0
  %1895 = vmatpush1.msra.mxu0 0.0
  %1896 = vmatprep.subr.mxu0 0.0
  %1897 = vmatpush1.msra.mxu0 0.0
  %1898 = vmatprep.subr.mxu0 0.0
  %1899 = vmatpush1.msra.mxu0 0.0
  %1900 = vmatprep.subr.mxu0 0.0
  %1901 = vmatpush1.msra.mxu0 0.0
  %1902 = vmatprep.subr.mxu0 0.0
  %1903 = vmatpush1.msra.mxu0 0.0
  %1904 = vmatprep.subr.mxu0 0.0
  %1905 = vmatpush1.msra.mxu0 0.0
  %1906 = vmatprep.subr.mxu0 0.0
  %1907 = vmatpush1.msra.mxu0 %v1174
  %1908 = vmatprep.subr.mxu0 0.0
  %1909 = vmatpush1.msra.mxu0 %v1173
  %1910 = vmatprep.subr.mxu0 0.0
  %1911 = vmatpush1.msra.mxu0 %v1172
  %1912 = vmatprep.subr.mxu0 0.0
  %1913 = vmatpush1.msra.mxu0 %v1171
  %1914 = vmatprep.subr.mxu0 0.0
  %1915 = vmatpush2.msra.mxu0 0.0
  %1916 = vmatprep.subr.mxu0 0.0
  %1917 = vmatpush2.msra.mxu0 0.0
  %1918 = vmatprep.subr.mxu0 0.0
  %1919 = vmatpush2.msra.mxu0 0.0
  %1920 = vmatprep.subr.mxu0 0.0
  %1921 = vmatpush2.msra.mxu0 0.0
  %1922 = vmatprep.subr.mxu0 0.0
  %1923 = vmatpush2.msra.mxu0 0.0
  %1924 = vmatprep.subr.mxu0 0.0
  %1925 = vmatpush2.msra.mxu0 0.0
  %1926 = vmatprep.subr.mxu0 0.0
  %1927 = vmatpush2.msra.mxu0 0.0
  %1928 = vmatprep.subr.mxu0 0.0
  %1929 = vmatpush2.msra.mxu0 0.0
  %1930 = vmatprep.subr.mxu0 0.0
  %1931 = vmatpush2.msra.mxu0 0.0
  %1932 = vmatprep.subr.mxu0 0.0
  %1933 = vmatpush2.msra.mxu0 0.0
  %1934 = vmatprep.subr.mxu0 0.0
  %1935 = vmatpush2.msra.mxu0 0.0
  %1936 = vmatprep.subr.mxu0 0.0
  %1937 = vmatpush2.msra.mxu0 0.0
  %1938 = vmatprep.subr.mxu0 0.0
  %1939 = vmatpush2.msra.mxu0 0.0
  %1940 = vmatprep.subr.mxu0 0.0
  %1941 = vmatpush2.msra.mxu0 0.0
  %1942 = vmatprep.subr.mxu0 0.0
  %1943 = vmatpush2.msra.mxu0 0.0
  %1944 = vmatprep.subr.mxu0 0.0
  %1945 = vmatpush2.msra.mxu0 0.0
  %1946 = vmatprep.mubr.f32.mxu0 0.0
  %1947 = vmatmul.mubr.f32.gmra.mxu0 %v1880
  %v1948 = vpop.f32.mrf.mxu0
  %v1949 = vadd.f32 0.0, %v1948
  %v1950 = vpop.f32.mrf.mxu0
  %1951 = vdwg.mxu0
  %v1952 = vadd.f32 %v1164, %v1949
  %v1953 = vxor.u32 %v1952, 2147483648
  %v1954 = vmul.f32 %v1953, 1.442695
  %v1955 = vpow.pop %v1954
  %v1956 = vadd.f32 %v1955, 1.0
  %v1957 = vrcp.pop %v1956
  %v1958 = vmul.f32 1.0, %v1957
  %v1959 = vtanh.pop %v1952
  %v1960 = vmul.f32 %v1958, %v1870
  %1962 = vrot.lane.b32.xlu0 %v1959, 64
  %v1963 = vpop.permute.xlu0 %1962
  %v1965 = vmul.f32 %v1958, %v1963
  %1967 = vrot.lane.b32.xlu0 %v1965, 32
  %v1968 = vpop.permute.xlu0 %1967
  %v1970 = vadd.f32 %v1960, %v1968
  %v1971 = vtanh.pop %v1970
  %1973 = vrot.lane.b32.xlu0 %v1971, 64
  %v1974 = vpop.permute.xlu0 %1973
  %v1976 = vmul.f32 %v1958, %v1974
  %1977 = vst.msk [vmem:[%s12] sm:$0xff] %vm62, %v1016
  %1979 = vrot.lane.b32.xlu0 %v1976, 32
  %v1980 = vpop.permute.xlu0 %1979
  %s1982 = scalar_lea.vmem %s12, 8
  %1983 = vst.msk [vmem:[%s1982] sm:$0xff] %vm62, %v1980
  %1985 = vrot.lane.b32.xlu0 %v1007, 96
  %v1986 = vpop.permute.xlu0 %1985
  %1988 = vst.msk [vmem:[%s13] sm:$0xff] %vm62, %v1986
  %1990 = vrot.lane.b32.xlu0 %v1970, 96
  %v1991 = vpop.permute.xlu0 %1990
  %s1993 = scalar_lea.vmem %s13, 8
  %1994 = vst.msk [vmem:[%s1993] sm:$0xff] %vm62, %v1991
  %v1995 = vld [vmem:[%s7] sm:$0xff]
  %v1996 = vld [vmem:[%s7 + $0x8] sm:$0xff]
  %v1997 = vld [vmem:[%s7 + $0x10] sm:$0xff]
  %v1998 = vld [vmem:[%s7 + $0x18] sm:$0xff]
  %v1999 = vld [vmem:[#allocation3] sm:$0x1]
  %v2001 = vlaneseq
  %v2002 = vshrl.u32 %v2001, 7
  %v2003 = vsub.s32 0, %v2002
  %v2004 = vrot.slane %v1999, %v2003
  %v2006 = vsel %vm62, %v1980, 0
  %2008 = vmatprep.subr.mxu0 0.0
  %2009 = vmatpush1.msra.mxu0 0.0
  %2010 = vmatprep.subr.mxu0 0.0
  %2011 = vmatpush1.msra.mxu0 0.0
  %2012 = vmatprep.subr.mxu0 0.0
  %2013 = vmatpush1.msra.mxu0 0.0
  %2014 = vmatprep.subr.mxu0 0.0
  %2015 = vmatpush1.msra.mxu0 0.0
  %2016 = vmatprep.subr.mxu0 0.0
  %2017 = vmatpush1.msra.mxu0 0.0
  %2018 = vmatprep.subr.mxu0 0.0
  %2019 = vmatpush1.msra.mxu0 0.0
  %2020 = vmatprep.subr.mxu0 0.0
  %2021 = vmatpush1.msra.mxu0 0.0
  %2022 = vmatprep.subr.mxu0 0.0
  %2023 = vmatpush1.msra.mxu0 0.0
  %2024 = vmatprep.subr.mxu0 0.0
  %2025 = vmatpush1.msra.mxu0 0.0
  %2026 = vmatprep.subr.mxu0 0.0
  %2027 = vmatpush1.msra.mxu0 0.0
  %2028 = vmatprep.subr.mxu0 0.0
  %2029 = vmatpush1.msra.mxu0 0.0
  %2030 = vmatprep.subr.mxu0 0.0
  %2031 = vmatpush1.msra.mxu0 0.0
  %2032 = vmatprep.subr.mxu0 0.0
  %2033 = vmatpush1.msra.mxu0 %v1998
  %2034 = vmatprep.subr.mxu0 0.0
  %2035 = vmatpush1.msra.mxu0 %v1997
  %2036 = vmatprep.subr.mxu0 0.0
  %2037 = vmatpush1.msra.mxu0 %v1996
  %2038 = vmatprep.subr.mxu0 0.0
  %2039 = vmatpush1.msra.mxu0 %v1995
  %2040 = vmatprep.subr.mxu0 0.0
  %2041 = vmatpush2.msra.mxu0 0.0
  %2042 = vmatprep.subr.mxu0 0.0
  %2043 = vmatpush2.msra.mxu0 0.0
  %2044 = vmatprep.subr.mxu0 0.0
  %2045 = vmatpush2.msra.mxu0 0.0
  %2046 = vmatprep.subr.mxu0 0.0
  %2047 = vmatpush2.msra.mxu0 0.0
  %2048 = vmatprep.subr.mxu0 0.0
  %2049 = vmatpush2.msra.mxu0 0.0
  %2050 = vmatprep.subr.mxu0 0.0
  %2051 = vmatpush2.msra.mxu0 0.0
  %2052 = vmatprep.subr.mxu0 0.0
  %2053 = vmatpush2.msra.mxu0 0.0
  %2054 = vmatprep.subr.mxu0 0.0
  %2055 = vmatpush2.msra.mxu0 0.0
  %2056 = vmatprep.subr.mxu0 0.0
  %2057 = vmatpush2.msra.mxu0 0.0
  %2058 = vmatprep.subr.mxu0 0.0
  %2059 = vmatpush2.msra.mxu0 0.0
  %2060 = vmatprep.subr.mxu0 0.0
  %2061 = vmatpush2.msra.mxu0 0.0
  %2062 = vmatprep.subr.mxu0 0.0
  %2063 = vmatpush2.msra.mxu0 0.0
  %2064 = vmatprep.subr.mxu0 0.0
  %2065 = vmatpush2.msra.mxu0 0.0
  %2066 = vmatprep.subr.mxu0 0.0
  %2067 = vmatpush2.msra.mxu0 0.0
  %2068 = vmatprep.subr.mxu0 0.0
  %2069 = vmatpush2.msra.mxu0 0.0
  %2070 = vmatprep.subr.mxu0 0.0
  %2071 = vmatpush2.msra.mxu0 0.0
  %2072 = vmatprep.mubr.f32.mxu0 0.0
  %2073 = vmatmul.mubr.f32.gmra.mxu0 %v2006
  %v2074 = vpop.f32.mrf.mxu0
  %v2075 = vadd.f32 %v2004, %v2074
  %v2076 = vpop.f32.mrf.mxu0
  %2077 = vdwg.mxu0
  %v2078 = vxor.u32 %v2075, 2147483648
  %v2079 = vmul.f32 %v2078, 1.442695
  %v2080 = vpow.pop %v2079
  %v2081 = vadd.f32 %v2080, 1.0
  %v2082 = vrcp.pop %v2081
  %v2083 = vmul.f32 1.0, %v2082
  %vm2084 = vcmask 7168
  %2085 = vst.msk [vmem:[%s11] sm:$0xff] %vm2084, %v2083
  // Predicated region
  $region46: #{sentiment_forward.1} parent=0 // pred_check
    _
  $region47: #{sentiment_forward.1} parent=0 // pred_check_branch
    %2087 = sbr.rel (0) target = $region49
  $region48: #{sentiment_forward.1} parent=0 // pred_region
    _
  $region49: #{sentiment_forward.1} parent=0 // pred_fallthru
    _
  // Predicated region
  $region50: #{sentiment_forward.1} parent=0 // pred_check
    _
  $region51: #{sentiment_forward.1} parent=0 // pred_check_branch
    %2089 = sbr.rel (0) target = $region53
  $region52: #{sentiment_forward.1} parent=0 // pred_region
    _
  $region53: #{sentiment_forward.1} parent=0 // pred_fallthru
    _
  // Predicated region
  $region54: #{sentiment_forward.1} parent=0 // pred_check
    _
  $region55: #{sentiment_forward.1} parent=0 // pred_check_branch
    %2091 = sbr.rel (0) target = $region57
  $region56: #{sentiment_forward.1} parent=0 // pred_region
    _
  $region57: #{sentiment_forward.1} parent=0 // pred_fallthru
    _
  // Predicated region
  $region58: #{sentiment_forward.1} parent=0 // pred_check
    _
  $region59: #{sentiment_forward.1} parent=0 // pred_check_branch
    %2093 = sbr.rel (0) target = $region61
  $region60: #{sentiment_forward.1} parent=0 // pred_region
    _
  $region61: #{sentiment_forward.1} parent=0 // pred_fallthru
    _
  // Predicated region
  $region62: #{sentiment_forward.1} parent=0 // pred_check
    _
  $region63: #{sentiment_forward.1} parent=0 // pred_check_branch
    %2095 = sbr.rel (0) target = $region65
  $region64: #{sentiment_forward.1} parent=0 // pred_region
    _
  $region65: #{sentiment_forward.1} parent=0 // pred_fallthru
    _
  // Predicated region
  $region66: #{sentiment_forward.1} parent=0 // pred_check
    _
  $region67: #{sentiment_forward.1} parent=0 // pred_check_branch
    %2097 = sbr.rel (0) target = $region69
  $region68: #{sentiment_forward.1} parent=0 // pred_region
    _
  $region69: #{sentiment_forward.1} parent=0 // pred_fallthru
    _

</llo_original>
